<compile_context>
chip_gen: v6e
topology: v6e:2x2x1
jax: 0.10.0
libtpu: 0.0.40
codegen_flags: <defaults>
</compile_context>

<pallas_src>
import jax
import jax.numpy as jnp
from jax import lax
from jax.experimental import pallas as pl
from jax.experimental.pallas import tpu as pltpu


_TOP = 8  # sublane-aligned first interior row of every padded scratch


# ----------------------------------------------------------------------------
# Fused Pallas kernel: [conv3x3 + folded-BN + ReLU] x 2, whole image per block
# ----------------------------------------------------------------------------
def up_fused_kernel(x_ref, skip_ref, t1x_ref, t1s_ref, t2_ref, b1_ref, b2_ref,
                    o_ref, xq_pad, sk_pad, h1_pad):
    # x_ref   : (1, H/2, (W/2)*Cx)   half-res input, lane-dense fused (w, c)
    # skip_ref: (1, H,   W*Cs)       skip connection, fused (w, c)
    # t1x_ref : (3, (W/2)*Cx, W*Cm)  bf16 block-Toeplitz conv1 weights (x region,
    #                                nearest W-upsample folded in), one per kh tap
    # t1s_ref : (3, W*Cs,     W*Cm)  bf16 block-Toeplitz conv1 weights (skip region)
    # t2_ref  : (3, W*Cm,     W*Co)  bf16 block-Toeplitz conv2 weights
    # b1_ref  : (1, W*Cm) f32        folded bias + BN shift, tiled over W
    # b2_ref  : (1, W*Co) f32
    # o_ref   : (1, H, W*Co)         lane-dense output slab
    # xq_pad  : (TOP+H+1, (W/2)*Cx)  f32 scratch, rows TOP..TOP+H-1 = H-upsampled x
    # sk_pad  : (TOP+H+1, W*Cs)      f32 scratch, rows TOP..TOP+H-1 = skip
    # h1_pad  : (TOP+H+1, W*Cm)      f32 scratch, rows TOP..TOP+H-1 = conv1 output
    h = x_ref.shape[1]
    H = skip_ref.shape[1]
    f32 = jnp.float32
    bf16 = jnp.bfloat16

    # ---- halo-only zeroing: one zero row above and below each interior -------
    # (per-step, NOT program_id==0-gated: with "parallel" megacore semantics
    #  each core owns its own scratch and scratch contents start undefined)
    for pad in (xq_pad, sk_pad, h1_pad):
        zrow = jnp.zeros((1, pad.shape[1]), f32)
        pad[_TOP - 1:_TOP, :] = zrow
        pad[_TOP + H:_TOP + H + 1, :] = zrow

    # ---- build conv-1 inputs in VMEM -----------------------------------------
    # H-direction nearest upsample = duplicate each half-res row into two
    # consecutive interior rows.  (W-upsample + channel concat are folded into
    # the Toeplitz weights, so no lane shuffling is needed here.)
    # TODO(synk): for larger H replace this unrolled loop with a bulk repeat /
    #             strided store.
    for rh in range(h):
        row = x_ref[0, rh:rh + 1, :]                       # (1, (W/2)*Cx)
        xq_pad[_TOP + 2 * rh:_TOP + 2 * rh + 2, :] = jnp.broadcast_to(
            row, (2, row.shape[1]))
    sk_pad[_TOP:_TOP + H, :] = skip_ref[0]                 # aligned bulk store

    def shifted(pad, dh):
        # rows (r + dh - 1) for r in [0, H); halo rows supply the zero padding.
        r0 = _TOP - 1 + dh                                 # static
        return pad[r0:r0 + H, :].astype(bf16)              # bf16 MXU operand

    # ---- conv1 + folded BN + ReLU: 6 row-shifted MXU matmuls, f32 accumulate --
    y1 = jnp.dot(shifted(xq_pad, 0), t1x_ref[0], preferred_element_type=f32)
    for dh in (1, 2):
        y1 += jnp.dot(shifted(xq_pad, dh), t1x_ref[dh], preferred_element_type=f32)
    for dh in (0, 1, 2):
        y1 += jnp.dot(shifted(sk_pad, dh), t1s_ref[dh], preferred_element_type=f32)
    h1 = jnp.maximum(y1 + b1_ref[...], 0.0)                # (H, W*Cm) f32

    # Intermediate stays in VMEM (no HBM round trip between the two convs).
    h1_pad[_TOP:_TOP + H, :] = h1

    # ---- conv2 + folded BN + ReLU ---------------------------------------------
    y2 = jnp.dot(shifted(h1_pad, 0), t2_ref[0], preferred_element_type=f32)
    for dh in (1, 2):
        y2 += jnp.dot(shifted(h1_pad, dh), t2_ref[dh], preferred_element_type=f32)
    out = jnp.maximum(y2 + b2_ref[...], 0.0)               # (H, W*Co) f32

    # Lane-dense store: last dim W*Cout is a multiple of 128.
    o_ref[0, :, :] = out.astype(o_ref.dtype)


# ----------------------------------------------------------------------------
# Block-Toeplitz weight construction (wrapper-side, built once per shape)
# ----------------------------------------------------------------------------
def _toeplitz(w_hwio, out_w):
    """(3,3,Ci,Co) HWIO conv weight -> (3, out_w*Ci, out_w*Co) matrices (one per
    kh tap) acting on lane-dense (rows, W*C) slabs.  Zero padding in W is
    encoded in the matrix (taps falling outside [0, W) are simply absent)."""
    kh, kw, ci, co = w_hwio.shape
    sp = jnp.arange(out_w)[:, None]                        # input  column s'
    s = jnp.arange(out_w)[None, :]                         # output column s
    dw = sp - s + 1                                        # tap index in [0, kw)
    valid = (dw >= 0) & (dw < kw)
    blocks = w_hwio[:, jnp.clip(dw, 0, kw - 1), :, :]      # (3, W, W, Ci, Co)
    blocks = jnp.where(valid[None, :, :, None, None], blocks, 0.0)
    return blocks.transpose(0, 1, 3, 2, 4).reshape(kh, out_w * ci, out_w * co)


def _toeplitz_upsample2(w_hwio, out_w):
    """Same as _toeplitz but the input stays at half width: the x2 nearest
    W-upsample is folded into the matrix.
    T[dh, q*Ci+ci, s*Co+co] = sum_{dw: 0<=s+dw-1<W, (s+dw-1)//2==q} w[dh,dw,ci,co]."""
    kh, kw, ci, co = w_hwio.shape
    half_w = out_w // 2
    q = jnp.arange(half_w)[:, None, None]                  # input (half-res) col
    s = jnp.arange(out_w)[None, :, None]                   # output col
    dw = jnp.arange(kw)[None, None, :]
    sin = s + dw - 1
    valid = (sin >= 0) & (sin < out_w) & ((sin // 2) == q)  # (W/2, W, kw)
    blocks = jnp.einsum('qsd,hdio->hqsio', valid.astype(w_hwio.dtype), w_hwio)
    return blocks.transpose(0, 1, 3, 2, 4).reshape(kh, half_w * ci, out_w * co)


# ----------------------------------------------------------------------------
# Parameter construction (deterministic, synthetic): fold BN (eval) + conv bias
# ----------------------------------------------------------------------------
def make_conv_bn_params(key, cin, cout):
    k1, k2, k3, k4, k5, k6 = jax.random.split(key, 6)
    w = jax.random.normal(k1, (3, 3, cin, cout), jnp.float32) * 0.1   # HWIO
    b = jax.random.normal(k2, (cout,), jnp.float32) * 0.1
    gamma = 1.0 + 0.1 * jax.random.normal(k3, (cout,), jnp.float32)
    beta = 0.1 * jax.random.normal(k4, (cout,), jnp.float32)
    running_mean = 0.1 * jax.random.normal(k5, (cout,), jnp.float32)
    running_var = 1.0 + 0.1 * jax.random.uniform(k6, (cout,), jnp.float32)
    eps = 1e-5
    # y = BN(conv(x) + b) = scale*conv(x) + (beta - mean*scale + b*scale)
    scale = gamma / jnp.sqrt(running_var + eps)
    w_folded = w * scale                       # broadcast over Cout (last axis)
    bias = beta - running_mean * scale + b * scale
    return w_folded, bias


# ----------------------------------------------------------------------------
# UpLayer forward (interpolate=True, dropout eval-mode identity)
# ----------------------------------------------------------------------------
def up_layer_forward(x_nchw, skip_nchw, params):
    (w1, b1), (w2, b2) = params            # HWIO weights with BN scale folded in
    n, cx, h, w_half = x_nchw.shape
    _, cs, H, W = skip_nchw.shape
    assert H == 2 * h and W == 2 * w_half
    cmid = w1.shape[-1]
    cout = w2.shape[-1]

    # NCHW -> lane-dense fused (rows, W*C).  These transposes are the only
    # wrapper-side activation copies: upsample & concat happen in-kernel.
    x_f = jnp.transpose(x_nchw, (0, 2, 3, 1)).reshape(n, h, w_half * cx)
    s_f = jnp.transpose(skip_nchw, (0, 2, 3, 1)).reshape(n, H, W * cs)

    # Block-Toeplitz weights (bf16 for the MXU; biases stay f32 for the epilogue).
    t1x = _toeplitz_upsample2(w1[:, :, :cx, :], W).astype(jnp.bfloat16)
    t1s = _toeplitz(w1[:, :, cx:, :], W).astype(jnp.bfloat16)
    t2 = _toeplitz(w2, W).astype(jnp.bfloat16)
    b1f = jnp.tile(b1, W).reshape(1, W * cmid).astype(jnp.float32)
    b2f = jnp.tile(b2, W).reshape(1, W * cout).astype(jnp.float32)

    rows = _TOP + H + 1
    out_f = pl.pallas_call(
        up_fused_kernel,
        out_shape=jax.ShapeDtypeStruct((n, H, W * cout), x_nchw.dtype),
        grid_spec=pltpu.PrefetchScalarGridSpec(
            num_scalar_prefetch=0,
            grid=(n,),
            in_specs=[
                pl.BlockSpec((1, h, w_half * cx), lambda i: (i, 0, 0)),
                pl.BlockSpec((1, H, W * cs), lambda i: (i, 0, 0)),
                # Constant block index => weights/bias DMA'd once, stay resident.
                pl.BlockSpec((3, w_half * cx, W * cmid), lambda i: (0, 0, 0)),
                pl.BlockSpec((3, W * cs, W * cmid), lambda i: (0, 0, 0)),
                pl.BlockSpec((3, W * cmid, W * cout), lambda i: (0, 0, 0)),
                pl.BlockSpec((1, W * cmid), lambda i: (0, 0)),
                pl.BlockSpec((1, W * cout), lambda i: (0, 0)),
            ],
            out_specs=pl.BlockSpec((1, H, W * cout), lambda i: (i, 0, 0)),
            scratch_shapes=[
                pltpu.VMEM((rows, w_half * cx), jnp.float32),
                pltpu.VMEM((rows, W * cs), jnp.float32),
                pltpu.VMEM((rows, W * cmid), jnp.float32),
            ],
        ),
        compiler_params=pltpu.CompilerParams(
            dimension_semantics=("parallel",),
        ),
    )(x_f, s_f, t1x, t1s, t2, b1f, b2f)

    # (N, H, W*Cout) -> NHWC -> NCHW (pure layout plumbing)
    return jnp.transpose(out_f.reshape(n, H, W, cout), (0, 3, 1, 2))


# ----------------------------------------------------------------------------
# Pure-JAX reference (for correctness check)
# ----------------------------------------------------------------------------
def ref_conv_bias_relu(x_nhwc, w_hwio, bias):
    y = lax.conv_general_dilated(
        x_nhwc, w_hwio, window_strides=(1, 1), padding="SAME",
        dimension_numbers=("NHWC", "HWIO", "NHWC"),
    )
    return jnp.maximum(y + bias.reshape(1, 1, 1, -1), 0.0)


def ref_forward(x_nchw, skip_nchw, params):
    (w1, b1), (w2, b2) = params
    x_up = jnp.repeat(jnp.repeat(x_nchw, 2, axis=2), 2, axis=3)
    x_cat = jnp.concatenate([x_up, skip_nchw], axis=1)
    x_nhwc = jnp.transpose(x_cat, (0, 2, 3, 1))
    h1 = ref_conv_bias_relu(x_nhwc, w1, b1)
    h2 = ref_conv_bias_relu(h1, w2, b2)
    return jnp.transpose(h2, (0, 3, 1, 2))


if __name__ == "__main__":
    # UpLayer(in_c=4, concat_c=4, out_c=8, type='2D', interpolate=True)
    N, in_c, concat_c, out_c = 2, 4, 4, 8
    H = W = 16  # pre-upsample spatial size -> 32x32 after upsample

    key = jax.random.PRNGKey(0)
    kx, ks, kp1, kp2 = jax.random.split(key, 4)

    x = jax.random.normal(kx, (N, in_c, H, W), jnp.float32)
    skip = jax.random.normal(ks, (N, concat_c, 2 * H, 2 * W), jnp.float32)

    params = (
        make_conv_bn_params(kp1, in_c + concat_c, out_c),  # first ConvLayer conv
        make_conv_bn_params(kp2, out_c, out_c),            # second conv
    )

    fwd = jax.jit(up_layer_forward)
    out = jax.block_until_ready(fwd(x, skip, params))
    ref = jax.block_until_ready(ref_forward(x, skip, params))

    assert out.shape == (N, out_c, 2 * H, 2 * W), out.shape
    # bf16 MXU operands (f32 accumulate) vs. a pure-f32 reference -> tolerance
    # loosened accordingly (see perf-review correctness note).
    max_err = float(jnp.max(jnp.abs(out - ref)))
    assert jnp.allclose(out, ref, rtol=3e-2, atol=3e-2), max_err

    print("KERNEL_OK")
</pallas_src>

<mosaic_0001>
module attributes {stable_mosaic.version = 11 : i64} {
  func.func @up_fused_kernel(%arg0: i32, %arg1: memref<1x16x64xf32, #tpu.memory_space<vmem>>, %arg2: memref<1x32x128xf32, #tpu.memory_space<vmem>>, %arg3: memref<3x64x256xbf16, #tpu.memory_space<vmem>>, %arg4: memref<3x128x256xbf16, #tpu.memory_space<vmem>>, %arg5: memref<3x256x256xbf16, #tpu.memory_space<vmem>>, %arg6: memref<1x256xf32, #tpu.memory_space<vmem>>, %arg7: memref<1x256xf32, #tpu.memory_space<vmem>>, %arg8: memref<1x32x256xf32, #tpu.memory_space<vmem>>, %arg9: memref<41x64xf32, #tpu.memory_space<vmem>>, %arg10: memref<41x128xf32, #tpu.memory_space<vmem>>, %arg11: memref<41x256xf32, #tpu.memory_space<vmem>>) attributes {dimension_semantics = [#tpu.dimension_semantics<parallel>], iteration_bounds = array<i64: 2>, scalar_prefetch = 0 : i64, scratch_operands = 3 : i64, tpu.core_type = #tpu.core_type<tc>, window_params = [{transform_indices = @transform_0, window_bounds = array<i64: 1, 16, 64>}, {transform_indices = @transform_1, window_bounds = array<i64: 1, 32, 128>}, {pipeline_mode = #tpu.pipeline_mode<synchronous>, transform_indices = @transform_2, window_bounds = array<i64: 3, 64, 256>}, {pipeline_mode = #tpu.pipeline_mode<synchronous>, transform_indices = @transform_3, window_bounds = array<i64: 3, 128, 256>}, {pipeline_mode = #tpu.pipeline_mode<synchronous>, transform_indices = @transform_4, window_bounds = array<i64: 3, 256, 256>}, {pipeline_mode = #tpu.pipeline_mode<synchronous>, transform_indices = @transform_5, window_bounds = array<i64: 1, 256>}, {pipeline_mode = #tpu.pipeline_mode<synchronous>, transform_indices = @transform_6, window_bounds = array<i64: 1, 256>}, {transform_indices = @transform_7, window_bounds = array<i64: 1, 32, 256>}]} {
    %cst = arith.constant 0.000000e+00 : f32
    %0 = vector.broadcast %cst : f32 to vector<1x64xf32>
    %c7 = arith.constant 7 : index
    %c0 = arith.constant 0 : index
    %1 = vector.load %arg9[%c7, %c0] : memref<41x64xf32, #tpu.memory_space<vmem>>, vector<1x64xf32>
    tpu.vector_store %arg9[%c7, %c0], %0 {strides = array<i32>} : memref<41x64xf32, #tpu.memory_space<vmem>>, vector<1x64xf32>,
    %c40 = arith.constant 40 : index
    %c0_0 = arith.constant 0 : index
    %2 = vector.load %arg9[%c40, %c0_0] : memref<41x64xf32, #tpu.memory_space<vmem>>, vector<1x64xf32>
    tpu.vector_store %arg9[%c40, %c0_0], %0 {strides = array<i32>} : memref<41x64xf32, #tpu.memory_space<vmem>>, vector<1x64xf32>,
    %cst_1 = arith.constant 0.000000e+00 : f32
    %3 = vector.broadcast %cst_1 : f32 to vector<1x128xf32>
    %c7_2 = arith.constant 7 : index
    %c0_3 = arith.constant 0 : index
    %4 = vector.load %arg10[%c7_2, %c0_3] : memref<41x128xf32, #tpu.memory_space<vmem>>, vector<1x128xf32>
    tpu.vector_store %arg10[%c7_2, %c0_3], %3 {strides = array<i32>} : memref<41x128xf32, #tpu.memory_space<vmem>>, vector<1x128xf32>,
    %c40_4 = arith.constant 40 : index
    %c0_5 = arith.constant 0 : index
    %5 = vector.load %arg10[%c40_4, %c0_5] : memref<41x128xf32, #tpu.memory_space<vmem>>, vector<1x128xf32>
    tpu.vector_store %arg10[%c40_4, %c0_5], %3 {strides = array<i32>} : memref<41x128xf32, #tpu.memory_space<vmem>>, vector<1x128xf32>,
    %cst_6 = arith.constant 0.000000e+00 : f32
    %6 = vector.broadcast %cst_6 : f32 to vector<1x256xf32>
    %c7_7 = arith.constant 7 : index
    %c0_8 = arith.constant 0 : index
    %7 = vector.load %arg11[%c7_7, %c0_8] : memref<41x256xf32, #tpu.memory_space<vmem>>, vector<1x256xf32>
    tpu.vector_store %arg11[%c7_7, %c0_8], %6 {strides = array<i32>} : memref<41x256xf32, #tpu.memory_space<vmem>>, vector<1x256xf32>,
    %c40_9 = arith.constant 40 : index
    %c0_10 = arith.constant 0 : index
    %8 = vector.load %arg11[%c40_9, %c0_10] : memref<41x256xf32, #tpu.memory_space<vmem>>, vector<1x256xf32>
    tpu.vector_store %arg11[%c40_9, %c0_10], %6 {strides = array<i32>} : memref<41x256xf32, #tpu.memory_space<vmem>>, vector<1x256xf32>,
    %c0_11 = arith.constant 0 : index
    %c0_12 = arith.constant 0 : index
    %c0_13 = arith.constant 0 : index
    %9 = vector.load %arg1[%c0_11, %c0_12, %c0_13] : memref<1x16x64xf32, #tpu.memory_space<vmem>>, vector<1x1x64xf32>
    %10 = vector.shape_cast %9 : vector<1x1x64xf32> to vector<1x64xf32>
    %11 = vector.shape_cast %10 : vector<1x64xf32> to vector<1x64xf32>
    %12 = vector.broadcast %11 : vector<1x64xf32> to vector<2x64xf32>
    %c8 = arith.constant 8 : index
    %c0_14 = arith.constant 0 : index
    %13 = vector.load %arg9[%c8, %c0_14] : memref<41x64xf32, #tpu.memory_space<vmem>>, vector<2x64xf32>
    tpu.vector_store %arg9[%c8, %c0_14], %12 {strides = array<i32>} : memref<41x64xf32, #tpu.memory_space<vmem>>, vector<2x64xf32>,
    %c0_15 = arith.constant 0 : index
    %c1 = arith.constant 1 : index
    %c0_16 = arith.constant 0 : index
    %14 = vector.load %arg1[%c0_15, %c1, %c0_16] : memref<1x16x64xf32, #tpu.memory_space<vmem>>, vector<1x1x64xf32>
    %15 = vector.shape_cast %14 : vector<1x1x64xf32> to vector<1x64xf32>
    %16 = vector.shape_cast %15 : vector<1x64xf32> to vector<1x64xf32>
    %17 = vector.broadcast %16 : vector<1x64xf32> to vector<2x64xf32>
    %c10 = arith.constant 10 : index
    %c0_17 = arith.constant 0 : index
    %18 = vector.load %arg9[%c10, %c0_17] : memref<41x64xf32, #tpu.memory_space<vmem>>, vector<2x64xf32>
    tpu.vector_store %arg9[%c10, %c0_17], %17 {strides = array<i32>} : memref<41x64xf32, #tpu.memory_space<vmem>>, vector<2x64xf32>,
    %c0_18 = arith.constant 0 : index
    %c2 = arith.constant 2 : index
    %c0_19 = arith.constant 0 : index
    %19 = vector.load %arg1[%c0_18, %c2, %c0_19] : memref<1x16x64xf32, #tpu.memory_space<vmem>>, vector<1x1x64xf32>
    %20 = vector.shape_cast %19 : vector<1x1x64xf32> to vector<1x64xf32>
    %21 = vector.shape_cast %20 : vector<1x64xf32> to vector<1x64xf32>
    %22 = vector.broadcast %21 : vector<1x64xf32> to vector<2x64xf32>
    %c12 = arith.constant 12 : index
    %c0_20 = arith.constant 0 : index
    %23 = vector.load %arg9[%c12, %c0_20] : memref<41x64xf32, #tpu.memory_space<vmem>>, vector<2x64xf32>
    tpu.vector_store %arg9[%c12, %c0_20], %22 {strides = array<i32>} : memref<41x64xf32, #tpu.memory_space<vmem>>, vector<2x64xf32>,
    %c0_21 = arith.constant 0 : index
    %c3 = arith.constant 3 : index
    %c0_22 = arith.constant 0 : index
    %24 = vector.load %arg1[%c0_21, %c3, %c0_22] : memref<1x16x64xf32, #tpu.memory_space<vmem>>, vector<1x1x64xf32>
    %25 = vector.shape_cast %24 : vector<1x1x64xf32> to vector<1x64xf32>
    %26 = vector.shape_cast %25 : vector<1x64xf32> to vector<1x64xf32>
    %27 = vector.broadcast %26 : vector<1x64xf32> to vector<2x64xf32>
    %c14 = arith.constant 14 : index
    %c0_23 = arith.constant 0 : index
    %28 = vector.load %arg9[%c14, %c0_23] : memref<41x64xf32, #tpu.memory_space<vmem>>, vector<2x64xf32>
    tpu.vector_store %arg9[%c14, %c0_23], %27 {strides = array<i32>} : memref<41x64xf32, #tpu.memory_space<vmem>>, vector<2x64xf32>,
    %c0_24 = arith.constant 0 : index
    %c4 = arith.constant 4 : index
    %c0_25 = arith.constant 0 : index
    %29 = vector.load %arg1[%c0_24, %c4, %c0_25] : memref<1x16x64xf32, #tpu.memory_space<vmem>>, vector<1x1x64xf32>
    %30 = vector.shape_cast %29 : vector<1x1x64xf32> to vector<1x64xf32>
    %31 = vector.shape_cast %30 : vector<1x64xf32> to vector<1x64xf32>
    %32 = vector.broadcast %31 : vector<1x64xf32> to vector<2x64xf32>
    %c16 = arith.constant 16 : index
    %c0_26 = arith.constant 0 : index
    %33 = vector.load %arg9[%c16, %c0_26] : memref<41x64xf32, #tpu.memory_space<vmem>>, vector<2x64xf32>
    tpu.vector_store %arg9[%c16, %c0_26], %32 {strides = array<i32>} : memref<41x64xf32, #tpu.memory_space<vmem>>, vector<2x64xf32>,
    %c0_27 = arith.constant 0 : index
    %c5 = arith.constant 5 : index
    %c0_28 = arith.constant 0 : index
    %34 = vector.load %arg1[%c0_27, %c5, %c0_28] : memref<1x16x64xf32, #tpu.memory_space<vmem>>, vector<1x1x64xf32>
    %35 = vector.shape_cast %34 : vector<1x1x64xf32> to vector<1x64xf32>
    %36 = vector.shape_cast %35 : vector<1x64xf32> to vector<1x64xf32>
    %37 = vector.broadcast %36 : vector<1x64xf32> to vector<2x64xf32>
    %c18 = arith.constant 18 : index
    %c0_29 = arith.constant 0 : index
    %38 = vector.load %arg9[%c18, %c0_29] : memref<41x64xf32, #tpu.memory_space<vmem>>, vector<2x64xf32>
    tpu.vector_store %arg9[%c18, %c0_29], %37 {strides = array<i32>} : memref<41x64xf32, #tpu.memory_space<vmem>>, vector<2x64xf32>,
    %c0_30 = arith.constant 0 : index
    %c6 = arith.constant 6 : index
    %c0_31 = arith.constant 0 : index
    %39 = vector.load %arg1[%c0_30, %c6, %c0_31] : memref<1x16x64xf32, #tpu.memory_space<vmem>>, vector<1x1x64xf32>
    %40 = vector.shape_cast %39 : vector<1x1x64xf32> to vector<1x64xf32>
    %41 = vector.shape_cast %40 : vector<1x64xf32> to vector<1x64xf32>
    %42 = vector.broadcast %41 : vector<1x64xf32> to vector<2x64xf32>
    %c20 = arith.constant 20 : index
    %c0_32 = arith.constant 0 : index
    %43 = vector.load %arg9[%c20, %c0_32] : memref<41x64xf32, #tpu.memory_space<vmem>>, vector<2x64xf32>
    tpu.vector_store %arg9[%c20, %c0_32], %42 {strides = array<i32>} : memref<41x64xf32, #tpu.memory_space<vmem>>, vector<2x64xf32>,
    %c0_33 = arith.constant 0 : index
    %c7_34 = arith.constant 7 : index
    %c0_35 = arith.constant 0 : index
    %44 = vector.load %arg1[%c0_33, %c7_34, %c0_35] : memref<1x16x64xf32, #tpu.memory_space<vmem>>, vector<1x1x64xf32>
    %45 = vector.shape_cast %44 : vector<1x1x64xf32> to vector<1x64xf32>
    %46 = vector.shape_cast %45 : vector<1x64xf32> to vector<1x64xf32>
    %47 = vector.broadcast %46 : vector<1x64xf32> to vector<2x64xf32>
    %c22 = arith.constant 22 : index
    %c0_36 = arith.constant 0 : index
    %48 = vector.load %arg9[%c22, %c0_36] : memref<41x64xf32, #tpu.memory_space<vmem>>, vector<2x64xf32>
    tpu.vector_store %arg9[%c22, %c0_36], %47 {strides = array<i32>} : memref<41x64xf32, #tpu.memory_space<vmem>>, vector<2x64xf32>,
    %c0_37 = arith.constant 0 : index
    %c8_38 = arith.constant 8 : index
    %c0_39 = arith.constant 0 : index
    %49 = vector.load %arg1[%c0_37, %c8_38, %c0_39] : memref<1x16x64xf32, #tpu.memory_space<vmem>>, vector<1x1x64xf32>
    %50 = vector.shape_cast %49 : vector<1x1x64xf32> to vector<1x64xf32>
    %51 = vector.shape_cast %50 : vector<1x64xf32> to vector<1x64xf32>
    %52 = vector.broadcast %51 : vector<1x64xf32> to vector<2x64xf32>
    %c24 = arith.constant 24 : index
    %c0_40 = arith.constant 0 : index
    %53 = vector.load %arg9[%c24, %c0_40] : memref<41x64xf32, #tpu.memory_space<vmem>>, vector<2x64xf32>
    tpu.vector_store %arg9[%c24, %c0_40], %52 {strides = array<i32>} : memref<41x64xf32, #tpu.memory_space<vmem>>, vector<2x64xf32>,
    %c0_41 = arith.constant 0 : index
    %c9 = arith.constant 9 : index
    %c0_42 = arith.constant 0 : index
    %54 = vector.load %arg1[%c0_41, %c9, %c0_42] : memref<1x16x64xf32, #tpu.memory_space<vmem>>, vector<1x1x64xf32>
    %55 = vector.shape_cast %54 : vector<1x1x64xf32> to vector<1x64xf32>
    %56 = vector.shape_cast %55 : vector<1x64xf32> to vector<1x64xf32>
    %57 = vector.broadcast %56 : vector<1x64xf32> to vector<2x64xf32>
    %c26 = arith.constant 26 : index
    %c0_43 = arith.constant 0 : index
    %58 = vector.load %arg9[%c26, %c0_43] : memref<41x64xf32, #tpu.memory_space<vmem>>, vector<2x64xf32>
    tpu.vector_store %arg9[%c26, %c0_43], %57 {strides = array<i32>} : memref<41x64xf32, #tpu.memory_space<vmem>>, vector<2x64xf32>,
    %c0_44 = arith.constant 0 : index
    %c10_45 = arith.constant 10 : index
    %c0_46 = arith.constant 0 : index
    %59 = vector.load %arg1[%c0_44, %c10_45, %c0_46] : memref<1x16x64xf32, #tpu.memory_space<vmem>>, vector<1x1x64xf32>
    %60 = vector.shape_cast %59 : vector<1x1x64xf32> to vector<1x64xf32>
    %61 = vector.shape_cast %60 : vector<1x64xf32> to vector<1x64xf32>
    %62 = vector.broadcast %61 : vector<1x64xf32> to vector<2x64xf32>
    %c28 = arith.constant 28 : index
    %c0_47 = arith.constant 0 : index
    %63 = vector.load %arg9[%c28, %c0_47] : memref<41x64xf32, #tpu.memory_space<vmem>>, vector<2x64xf32>
    tpu.vector_store %arg9[%c28, %c0_47], %62 {strides = array<i32>} : memref<41x64xf32, #tpu.memory_space<vmem>>, vector<2x64xf32>,
    %c0_48 = arith.constant 0 : index
    %c11 = arith.constant 11 : index
    %c0_49 = arith.constant 0 : index
    %64 = vector.load %arg1[%c0_48, %c11, %c0_49] : memref<1x16x64xf32, #tpu.memory_space<vmem>>, vector<1x1x64xf32>
    %65 = vector.shape_cast %64 : vector<1x1x64xf32> to vector<1x64xf32>
    %66 = vector.shape_cast %65 : vector<1x64xf32> to vector<1x64xf32>
    %67 = vector.broadcast %66 : vector<1x64xf32> to vector<2x64xf32>
    %c30 = arith.constant 30 : index
    %c0_50 = arith.constant 0 : index
    %68 = vector.load %arg9[%c30, %c0_50] : memref<41x64xf32, #tpu.memory_space<vmem>>, vector<2x64xf32>
    tpu.vector_store %arg9[%c30, %c0_50], %67 {strides = array<i32>} : memref<41x64xf32, #tpu.memory_space<vmem>>, vector<2x64xf32>,
    %c0_51 = arith.constant 0 : index
    %c12_52 = arith.constant 12 : index
    %c0_53 = arith.constant 0 : index
    %69 = vector.load %arg1[%c0_51, %c12_52, %c0_53] : memref<1x16x64xf32, #tpu.memory_space<vmem>>, vector<1x1x64xf32>
    %70 = vector.shape_cast %69 : vector<1x1x64xf32> to vector<1x64xf32>
    %71 = vector.shape_cast %70 : vector<1x64xf32> to vector<1x64xf32>
    %72 = vector.broadcast %71 : vector<1x64xf32> to vector<2x64xf32>
    %c32 = arith.constant 32 : index
    %c0_54 = arith.constant 0 : index
    %73 = vector.load %arg9[%c32, %c0_54] : memref<41x64xf32, #tpu.memory_space<vmem>>, vector<2x64xf32>
    tpu.vector_store %arg9[%c32, %c0_54], %72 {strides = array<i32>} : memref<41x64xf32, #tpu.memory_space<vmem>>, vector<2x64xf32>,
    %c0_55 = arith.constant 0 : index
    %c13 = arith.constant 13 : index
    %c0_56 = arith.constant 0 : index
    %74 = vector.load %arg1[%c0_55, %c13, %c0_56] : memref<1x16x64xf32, #tpu.memory_space<vmem>>, vector<1x1x64xf32>
    %75 = vector.shape_cast %74 : vector<1x1x64xf32> to vector<1x64xf32>
    %76 = vector.shape_cast %75 : vector<1x64xf32> to vector<1x64xf32>
    %77 = vector.broadcast %76 : vector<1x64xf32> to vector<2x64xf32>
    %c34 = arith.constant 34 : index
    %c0_57 = arith.constant 0 : index
    %78 = vector.load %arg9[%c34, %c0_57] : memref<41x64xf32, #tpu.memory_space<vmem>>, vector<2x64xf32>
    tpu.vector_store %arg9[%c34, %c0_57], %77 {strides = array<i32>} : memref<41x64xf32, #tpu.memory_space<vmem>>, vector<2x64xf32>,
    %c0_58 = arith.constant 0 : index
    %c14_59 = arith.constant 14 : index
    %c0_60 = arith.constant 0 : index
    %79 = vector.load %arg1[%c0_58, %c14_59, %c0_60] : memref<1x16x64xf32, #tpu.memory_space<vmem>>, vector<1x1x64xf32>
    %80 = vector.shape_cast %79 : vector<1x1x64xf32> to vector<1x64xf32>
    %81 = vector.shape_cast %80 : vector<1x64xf32> to vector<1x64xf32>
    %82 = vector.broadcast %81 : vector<1x64xf32> to vector<2x64xf32>
    %c36 = arith.constant 36 : index
    %c0_61 = arith.constant 0 : index
    %83 = vector.load %arg9[%c36, %c0_61] : memref<41x64xf32, #tpu.memory_space<vmem>>, vector<2x64xf32>
    tpu.vector_store %arg9[%c36, %c0_61], %82 {strides = array<i32>} : memref<41x64xf32, #tpu.memory_space<vmem>>, vector<2x64xf32>,
    %c0_62 = arith.constant 0 : index
    %c15 = arith.constant 15 : index
    %c0_63 = arith.constant 0 : index
    %84 = vector.load %arg1[%c0_62, %c15, %c0_63] : memref<1x16x64xf32, #tpu.memory_space<vmem>>, vector<1x1x64xf32>
    %85 = vector.shape_cast %84 : vector<1x1x64xf32> to vector<1x64xf32>
    %86 = vector.shape_cast %85 : vector<1x64xf32> to vector<1x64xf32>
    %87 = vector.broadcast %86 : vector<1x64xf32> to vector<2x64xf32>
    %c38 = arith.constant 38 : index
    %c0_64 = arith.constant 0 : index
    %88 = vector.load %arg9[%c38, %c0_64] : memref<41x64xf32, #tpu.memory_space<vmem>>, vector<2x64xf32>
    tpu.vector_store %arg9[%c38, %c0_64], %87 {strides = array<i32>} : memref<41x64xf32, #tpu.memory_space<vmem>>, vector<2x64xf32>,
    %c0_65 = arith.constant 0 : index
    %c0_66 = arith.constant 0 : index
    %c0_67 = arith.constant 0 : index
    %89 = vector.load %arg2[%c0_65, %c0_66, %c0_67] : memref<1x32x128xf32, #tpu.memory_space<vmem>>, vector<1x32x128xf32>
    %90 = vector.shape_cast %89 : vector<1x32x128xf32> to vector<32x128xf32>
    %c8_68 = arith.constant 8 : index
    %c0_69 = arith.constant 0 : index
    %91 = vector.load %arg10[%c8_68, %c0_69] : memref<41x128xf32, #tpu.memory_space<vmem>>, vector<32x128xf32>
    tpu.vector_store %arg10[%c8_68, %c0_69], %90 {strides = array<i32>} : memref<41x128xf32, #tpu.memory_space<vmem>>, vector<32x128xf32>,
    %c7_70 = arith.constant 7 : index
    %c0_71 = arith.constant 0 : index
    %92 = vector.load %arg9[%c7_70, %c0_71] : memref<41x64xf32, #tpu.memory_space<vmem>>, vector<32x64xf32>
    %93 = arith.truncf %92 : vector<32x64xf32> to vector<32x64xbf16>
    %c0_72 = arith.constant 0 : index
    %c0_73 = arith.constant 0 : index
    %c0_74 = arith.constant 0 : index
    %94 = vector.load %arg3[%c0_72, %c0_73, %c0_74] : memref<3x64x256xbf16, #tpu.memory_space<vmem>>, vector<1x64x256xbf16>
    %95 = vector.shape_cast %94 : vector<1x64x256xbf16> to vector<64x256xbf16>
    %cst_75 = arith.constant dense<0.000000e+00> : vector<32x256xf32>
    %96 = tpu.matmul %93, %95, %cst_75 {dimension_numbers = #tpu.dot_dimension_numbers<[1], [0], [0], [1], [0, 0, 1, 1], [], []>} : vector<32x64xbf16>, vector<64x256xbf16>, vector<32x256xf32> -> vector<32x256xf32>
    %c8_76 = arith.constant 8 : index
    %c0_77 = arith.constant 0 : index
    %97 = vector.load %arg9[%c8_76, %c0_77] : memref<41x64xf32, #tpu.memory_space<vmem>>, vector<32x64xf32>
    %98 = arith.truncf %97 : vector<32x64xf32> to vector<32x64xbf16>
    %c1_78 = arith.constant 1 : index
    %c0_79 = arith.constant 0 : index
    %c0_80 = arith.constant 0 : index
    %99 = vector.load %arg3[%c1_78, %c0_79, %c0_80] : memref<3x64x256xbf16, #tpu.memory_space<vmem>>, vector<1x64x256xbf16>
    %100 = vector.shape_cast %99 : vector<1x64x256xbf16> to vector<64x256xbf16>
    %cst_81 = arith.constant dense<0.000000e+00> : vector<32x256xf32>
    %101 = tpu.matmul %98, %100, %cst_81 {dimension_numbers = #tpu.dot_dimension_numbers<[1], [0], [0], [1], [0, 0, 1, 1], [], []>} : vector<32x64xbf16>, vector<64x256xbf16>, vector<32x256xf32> -> vector<32x256xf32>
    %102 = arith.addf %96, %101 : vector<32x256xf32>
    %c9_82 = arith.constant 9 : index
    %c0_83 = arith.constant 0 : index
    %103 = vector.load %arg9[%c9_82, %c0_83] : memref<41x64xf32, #tpu.memory_space<vmem>>, vector<32x64xf32>
    %104 = arith.truncf %103 : vector<32x64xf32> to vector<32x64xbf16>
    %c2_84 = arith.constant 2 : index
    %c0_85 = arith.constant 0 : index
    %c0_86 = arith.constant 0 : index
    %105 = vector.load %arg3[%c2_84, %c0_85, %c0_86] : memref<3x64x256xbf16, #tpu.memory_space<vmem>>, vector<1x64x256xbf16>
    %106 = vector.shape_cast %105 : vector<1x64x256xbf16> to vector<64x256xbf16>
    %cst_87 = arith.constant dense<0.000000e+00> : vector<32x256xf32>
    %107 = tpu.matmul %104, %106, %cst_87 {dimension_numbers = #tpu.dot_dimension_numbers<[1], [0], [0], [1], [0, 0, 1, 1], [], []>} : vector<32x64xbf16>, vector<64x256xbf16>, vector<32x256xf32> -> vector<32x256xf32>
    %108 = arith.addf %102, %107 : vector<32x256xf32>
    %c7_88 = arith.constant 7 : index
    %c0_89 = arith.constant 0 : index
    %109 = vector.load %arg10[%c7_88, %c0_89] : memref<41x128xf32, #tpu.memory_space<vmem>>, vector<32x128xf32>
    %110 = arith.truncf %109 : vector<32x128xf32> to vector<32x128xbf16>
    %c0_90 = arith.constant 0 : index
    %c0_91 = arith.constant 0 : index
    %c0_92 = arith.constant 0 : index
    %111 = vector.load %arg4[%c0_90, %c0_91, %c0_92] : memref<3x128x256xbf16, #tpu.memory_space<vmem>>, vector<1x128x256xbf16>
    %112 = vector.shape_cast %111 : vector<1x128x256xbf16> to vector<128x256xbf16>
    %cst_93 = arith.constant dense<0.000000e+00> : vector<32x256xf32>
    %113 = tpu.matmul %110, %112, %cst_93 {dimension_numbers = #tpu.dot_dimension_numbers<[1], [0], [0], [1], [0, 0, 1, 1], [], []>} : vector<32x128xbf16>, vector<128x256xbf16>, vector<32x256xf32> -> vector<32x256xf32>
    %114 = arith.addf %108, %113 : vector<32x256xf32>
    %c8_94 = arith.constant 8 : index
    %c0_95 = arith.constant 0 : index
    %115 = vector.load %arg10[%c8_94, %c0_95] : memref<41x128xf32, #tpu.memory_space<vmem>>, vector<32x128xf32>
    %116 = arith.truncf %115 : vector<32x128xf32> to vector<32x128xbf16>
    %c1_96 = arith.constant 1 : index
    %c0_97 = arith.constant 0 : index
    %c0_98 = arith.constant 0 : index
    %117 = vector.load %arg4[%c1_96, %c0_97, %c0_98] : memref<3x128x256xbf16, #tpu.memory_space<vmem>>, vector<1x128x256xbf16>
    %118 = vector.shape_cast %117 : vector<1x128x256xbf16> to vector<128x256xbf16>
    %cst_99 = arith.constant dense<0.000000e+00> : vector<32x256xf32>
    %119 = tpu.matmul %116, %118, %cst_99 {dimension_numbers = #tpu.dot_dimension_numbers<[1], [0], [0], [1], [0, 0, 1, 1], [], []>} : vector<32x128xbf16>, vector<128x256xbf16>, vector<32x256xf32> -> vector<32x256xf32>
    %120 = arith.addf %114, %119 : vector<32x256xf32>
    %c9_100 = arith.constant 9 : index
    %c0_101 = arith.constant 0 : index
    %121 = vector.load %arg10[%c9_100, %c0_101] : memref<41x128xf32, #tpu.memory_space<vmem>>, vector<32x128xf32>
    %122 = arith.truncf %121 : vector<32x128xf32> to vector<32x128xbf16>
    %c2_102 = arith.constant 2 : index
    %c0_103 = arith.constant 0 : index
    %c0_104 = arith.constant 0 : index
    %123 = vector.load %arg4[%c2_102, %c0_103, %c0_104] : memref<3x128x256xbf16, #tpu.memory_space<vmem>>, vector<1x128x256xbf16>
    %124 = vector.shape_cast %123 : vector<1x128x256xbf16> to vector<128x256xbf16>
    %cst_105 = arith.constant dense<0.000000e+00> : vector<32x256xf32>
    %125 = tpu.matmul %122, %124, %cst_105 {dimension_numbers = #tpu.dot_dimension_numbers<[1], [0], [0], [1], [0, 0, 1, 1], [], []>} : vector<32x128xbf16>, vector<128x256xbf16>, vector<32x256xf32> -> vector<32x256xf32>
    %126 = arith.addf %120, %125 : vector<32x256xf32>
    %c0_106 = arith.constant 0 : index
    %c0_107 = arith.constant 0 : index
    %127 = vector.load %arg6[%c0_106, %c0_107] : memref<1x256xf32, #tpu.memory_space<vmem>>, vector<1x256xf32>
    %128 = vector.broadcast %127 : vector<1x256xf32> to vector<32x256xf32>
    %129 = arith.addf %126, %128 : vector<32x256xf32>
    %cst_108 = arith.constant 0.000000e+00 : f32
    %130 = vector.broadcast %cst_108 : f32 to vector<32x256xf32>
    %131 = arith.maximumf %129, %130 : vector<32x256xf32>
    %c8_109 = arith.constant 8 : index
    %c0_110 = arith.constant 0 : index
    %132 = vector.load %arg11[%c8_109, %c0_110] : memref<41x256xf32, #tpu.memory_space<vmem>>, vector<32x256xf32>
    tpu.vector_store %arg11[%c8_109, %c0_110], %131 {strides = array<i32>} : memref<41x256xf32, #tpu.memory_space<vmem>>, vector<32x256xf32>,
    %c7_111 = arith.constant 7 : index
    %c0_112 = arith.constant 0 : index
    %133 = vector.load %arg11[%c7_111, %c0_112] : memref<41x256xf32, #tpu.memory_space<vmem>>, vector<32x256xf32>
    %134 = arith.truncf %133 : vector<32x256xf32> to vector<32x256xbf16>
    %c0_113 = arith.constant 0 : index
    %c0_114 = arith.constant 0 : index
    %c0_115 = arith.constant 0 : index
    %135 = vector.load %arg5[%c0_113, %c0_114, %c0_115] : memref<3x256x256xbf16, #tpu.memory_space<vmem>>, vector<1x256x256xbf16>
    %136 = vector.shape_cast %135 : vector<1x256x256xbf16> to vector<256x256xbf16>
    %cst_116 = arith.constant dense<0.000000e+00> : vector<32x256xf32>
    %137 = tpu.matmul %134, %136, %cst_116 {dimension_numbers = #tpu.dot_dimension_numbers<[1], [0], [0], [1], [0, 0, 1, 1], [], []>} : vector<32x256xbf16>, vector<256x256xbf16>, vector<32x256xf32> -> vector<32x256xf32>
    %c8_117 = arith.constant 8 : index
    %c0_118 = arith.constant 0 : index
    %138 = vector.load %arg11[%c8_117, %c0_118] : memref<41x256xf32, #tpu.memory_space<vmem>>, vector<32x256xf32>
    %139 = arith.truncf %138 : vector<32x256xf32> to vector<32x256xbf16>
    %c1_119 = arith.constant 1 : index
    %c0_120 = arith.constant 0 : index
    %c0_121 = arith.constant 0 : index
    %140 = vector.load %arg5[%c1_119, %c0_120, %c0_121] : memref<3x256x256xbf16, #tpu.memory_space<vmem>>, vector<1x256x256xbf16>
    %141 = vector.shape_cast %140 : vector<1x256x256xbf16> to vector<256x256xbf16>
    %cst_122 = arith.constant dense<0.000000e+00> : vector<32x256xf32>
    %142 = tpu.matmul %139, %141, %cst_122 {dimension_numbers = #tpu.dot_dimension_numbers<[1], [0], [0], [1], [0, 0, 1, 1], [], []>} : vector<32x256xbf16>, vector<256x256xbf16>, vector<32x256xf32> -> vector<32x256xf32>
    %143 = arith.addf %137, %142 : vector<32x256xf32>
    %c9_123 = arith.constant 9 : index
    %c0_124 = arith.constant 0 : index
    %144 = vector.load %arg11[%c9_123, %c0_124] : memref<41x256xf32, #tpu.memory_space<vmem>>, vector<32x256xf32>
    %145 = arith.truncf %144 : vector<32x256xf32> to vector<32x256xbf16>
    %c2_125 = arith.constant 2 : index
    %c0_126 = arith.constant 0 : index
    %c0_127 = arith.constant 0 : index
    %146 = vector.load %arg5[%c2_125, %c0_126, %c0_127] : memref<3x256x256xbf16, #tpu.memory_space<vmem>>, vector<1x256x256xbf16>
    %147 = vector.shape_cast %146 : vector<1x256x256xbf16> to vector<256x256xbf16>
    %cst_128 = arith.constant dense<0.000000e+00> : vector<32x256xf32>
    %148 = tpu.matmul %145, %147, %cst_128 {dimension_numbers = #tpu.dot_dimension_numbers<[1], [0], [0], [1], [0, 0, 1, 1], [], []>} : vector<32x256xbf16>, vector<256x256xbf16>, vector<32x256xf32> -> vector<32x256xf32>
    %149 = arith.addf %143, %148 : vector<32x256xf32>
    %c0_129 = arith.constant 0 : index
    %c0_130 = arith.constant 0 : index
    %150 = vector.load %arg7[%c0_129, %c0_130] : memref<1x256xf32, #tpu.memory_space<vmem>>, vector<1x256xf32>
    %151 = vector.broadcast %150 : vector<1x256xf32> to vector<32x256xf32>
    %152 = arith.addf %149, %151 : vector<32x256xf32>
    %cst_131 = arith.constant 0.000000e+00 : f32
    %153 = vector.broadcast %cst_131 : f32 to vector<32x256xf32>
    %154 = arith.maximumf %152, %153 : vector<32x256xf32>
    %c0_132 = arith.constant 0 : index
    %c0_133 = arith.constant 0 : index
    %c0_134 = arith.constant 0 : index
    %155 = vector.load %arg8[%c0_132, %c0_133, %c0_134] : memref<1x32x256xf32, #tpu.memory_space<vmem>>, vector<1x32x256xf32>
    %156 = vector.shape_cast %155 : vector<1x32x256xf32> to vector<32x256xf32>
    %157 = vector.shape_cast %154 : vector<32x256xf32> to vector<1x32x256xf32>
    tpu.vector_store %arg8[%c0_132, %c0_133, %c0_134], %157 {strides = array<i32>} : memref<1x32x256xf32, #tpu.memory_space<vmem>>, vector<1x32x256xf32>,
    return
  }
  func.func @transform_0(%arg0: i32) -> (i32, i32, i32) {
    %c0_i32 = arith.constant 0 : i32
    %c0_i32_0 = arith.constant 0 : i32
    %c0_i32_1 = arith.constant 0 : i32
    return %arg0, %c0_i32, %c0_i32_0 : i32, i32, i32
  }
  func.func @transform_1(%arg0: i32) -> (i32, i32, i32) {
    %c0_i32 = arith.constant 0 : i32
    %c0_i32_0 = arith.constant 0 : i32
    %c0_i32_1 = arith.constant 0 : i32
    return %arg0, %c0_i32, %c0_i32_0 : i32, i32, i32
  }
  func.func @transform_2(%arg0: i32) -> (i32, i32, i32) {
    %c0_i32 = arith.constant 0 : i32
    %c0_i32_0 = arith.constant 0 : i32
    %c0_i32_1 = arith.constant 0 : i32
    %c0_i32_2 = arith.constant 0 : i32
    return %c0_i32, %c0_i32_0, %c0_i32_1 : i32, i32, i32
  }
  func.func @transform_3(%arg0: i32) -> (i32, i32, i32) {
    %c0_i32 = arith.constant 0 : i32
    %c0_i32_0 = arith.constant 0 : i32
    %c0_i32_1 = arith.constant 0 : i32
    %c0_i32_2 = arith.constant 0 : i32
    return %c0_i32, %c0_i32_0, %c0_i32_1 : i32, i32, i32
  }
  func.func @transform_4(%arg0: i32) -> (i32, i32, i32) {
    %c0_i32 = arith.constant 0 : i32
    %c0_i32_0 = arith.constant 0 : i32
    %c0_i32_1 = arith.constant 0 : i32
    %c0_i32_2 = arith.constant 0 : i32
    return %c0_i32, %c0_i32_0, %c0_i32_1 : i32, i32, i32
  }
  func.func @transform_5(%arg0: i32) -> (i32, i32) {
    %c0_i32 = arith.constant 0 : i32
    %c0_i32_0 = arith.constant 0 : i32
    %c0_i32_1 = arith.constant 0 : i32
    return %c0_i32, %c0_i32_0 : i32, i32
  }
  func.func @transform_6(%arg0: i32) -> (i32, i32) {
    %c0_i32 = arith.constant 0 : i32
    %c0_i32_0 = arith.constant 0 : i32
    %c0_i32_1 = arith.constant 0 : i32
    return %c0_i32, %c0_i32_0 : i32, i32
  }
  func.func @transform_7(%arg0: i32) -> (i32, i32, i32) {
    %c0_i32 = arith.constant 0 : i32
    %c0_i32_0 = arith.constant 0 : i32
    %c0_i32_1 = arith.constant 0 : i32
    return %arg0, %c0_i32, %c0_i32_0 : i32, i32, i32
  }
}

</mosaic_0001>

<llo_original>
// kernel: tile.13
$region0: #{tile.13}
  #allocation0 [shape = 's32[1]{0}', space=sflag, size = 0x4, scoped, tag = 'scoped memory for tile.13']
  %s0 = inlined_call_operand.vmem [shape: f32[8], index: 0, kind: input, shape index: {}]
  %s1 = inlined_call_operand.vmem [shape: f32[32,8], index: 1, kind: output, shape index: {}]
  // Predicated region
  $region2: #{tile.13} parent=0 // pred_check
    _
  $region3: #{tile.13} parent=0 // pred_check_branch
    %3 = sbr.rel (0) target = $region5
  $region4: #{tile.13} parent=0 // pred_region
    _
  $region5: #{tile.13} parent=0 // pred_fallthru
    _
  %v4 = vld [vmem:[%s0] ss:$0 sm:$0xff]
  %5 = vst [vmem:[%s1] sm:$0xff] %v4
  %s6 = scalar_lea.vmem %s1, 8
  %7 = vst [vmem:[%s6] sm:$0xff] %v4
  %s8 = scalar_lea.vmem %s1, 16
  %9 = vst [vmem:[%s8] sm:$0xff] %v4
  %s10 = scalar_lea.vmem %s1, 24
  %11 = vst [vmem:[%s10] sm:$0xff] %v4

// kernel: tile.14
$region0: #{tile.14}
  %s0 = inlined_call_operand.vmem [shape: f32[32,8], index: 0, kind: input, shape index: {}]
  %s1 = inlined_call_operand.vmem [shape: f32[1,256], index: 1, kind: output, shape index: {}]
  $region1: #{tile.14} parent=0
    #allocation0 [shape = 'u8[8192]{0}', space=vmem, size = 0x2000, scoped, tag = 'scoped mem for output reshape']
    %s2 = smov 3
    %v3 = vld [vmem:[%s0] ss:$16 sm:%s2]
    %vm4 = vcmask 64512
    %5 = vst.msk [vmem:[#allocation0] ss:$8 sm:$0x3] %vm4, %v3
    %s6 = scalar_lea.vmem %s0, 15
    %s7 = smov 3
    %v8 = vld [vmem:[%s6] ss:$16 sm:%s7]
    %9 = vrot.lane.b32.xlu0 %v8, 120
    %v10 = vpop.permute.xlu0 %9
    %vm11 = vcmask 1048512
    %12 = vst.msk [vmem:[#allocation0] ss:$8 sm:$0x3] %vm11, %v10
    %s13 = scalar_lea.vmem %s0, 14
    %s14 = smov 3
    %v15 = vld [vmem:[%s13] ss:$16 sm:%s14]
    %16 = vrot.lane.b32.xlu0 %v15, 112
    %v17 = vpop.permute.xlu0 %16
    %vm18 = vcmask 982912
    %19 = vst.msk [vmem:[#allocation0] ss:$8 sm:$0x3] %vm18, %v17
    %s20 = scalar_lea.vmem %s0, 13
    %s21 = smov 3
    %v22 = vld [vmem:[%s20] ss:$16 sm:%s21]
    %23 = vrot.lane.b32.xlu0 %v22, 104
    %v24 = vpop.permute.xlu0 %23
    %vm25 = vcmask 917312
    %26 = vst.msk [vmem:[#allocation0] ss:$8 sm:$0x3] %vm25, %v24
    %s27 = scalar_lea.vmem %s0, 12
    %s28 = smov 3
    %v29 = vld [vmem:[%s27] ss:$16 sm:%s28]
    %30 = vrot.lane.b32.xlu0 %v29, 96
    %v31 = vpop.permute.xlu0 %30
    %vm32 = vcmask 851712
    %33 = vst.msk [vmem:[#allocation0] ss:$8 sm:$0x3] %vm32, %v31
    %s34 = scalar_lea.vmem %s0, 11
    %s35 = smov 3
    %v36 = vld [vmem:[%s34] ss:$16 sm:%s35]
    %37 = vrot.lane.b32.xlu0 %v36, 88
    %v38 = vpop.permute.xlu0 %37
    %vm39 = vcmask 786112
    %40 = vst.msk [vmem:[#allocation0] ss:$8 sm:$0x3] %vm39, %v38
    %s41 = scalar_lea.vmem %s0, 10
    %s42 = smov 3
    %v43 = vld [vmem:[%s41] ss:$16 sm:%s42]
    %44 = vrot.lane.b32.xlu0 %v43, 80
    %v45 = vpop.permute.xlu0 %44
    %vm46 = vcmask 720512
    %47 = vst.msk [vmem:[#allocation0] ss:$8 sm:$0x3] %vm46, %v45
    %s48 = scalar_lea.vmem %s0, 9
    %s49 = smov 3
    %v50 = vld [vmem:[%s48] ss:$16 sm:%s49]
    %51 = vrot.lane.b32.xlu0 %v50, 72
    %v52 = vpop.permute.xlu0 %51
    %vm53 = vcmask 654912
    %54 = vst.msk [vmem:[#allocation0] ss:$8 sm:$0x3] %vm53, %v52
    %s55 = scalar_lea.vmem %s0, 8
    %s56 = smov 3
    %v57 = vld [vmem:[%s55] ss:$16 sm:%s56]
    %58 = vrot.lane.b32.xlu0 %v57, 64
    %v59 = vpop.permute.xlu0 %58
    %vm60 = vcmask 589312
    %61 = vst.msk [vmem:[#allocation0] ss:$8 sm:$0x3] %vm60, %v59
    %s62 = scalar_lea.vmem %s0, 7
    %s63 = smov 3
    %v64 = vld [vmem:[%s62] ss:$16 sm:%s63]
    %65 = vrot.lane.b32.xlu0 %v64, 56
    %v66 = vpop.permute.xlu0 %65
    %vm67 = vcmask 523712
    %68 = vst.msk [vmem:[#allocation0] ss:$8 sm:$0x3] %vm67, %v66
    %s69 = scalar_lea.vmem %s0, 6
    %s70 = smov 3
    %v71 = vld [vmem:[%s69] ss:$16 sm:%s70]
    %72 = vrot.lane.b32.xlu0 %v71, 48
    %v73 = vpop.permute.xlu0 %72
    %vm74 = vcmask 458112
    %75 = vst.msk [vmem:[#allocation0] ss:$8 sm:$0x3] %vm74, %v73
    %s76 = scalar_lea.vmem %s0, 5
    %s77 = smov 3
    %v78 = vld [vmem:[%s76] ss:$16 sm:%s77]
    %79 = vrot.lane.b32.xlu0 %v78, 40
    %v80 = vpop.permute.xlu0 %79
    %vm81 = vcmask 392512
    %82 = vst.msk [vmem:[#allocation0] ss:$8 sm:$0x3] %vm81, %v80
    %s83 = scalar_lea.vmem %s0, 4
    %s84 = smov 3
    %v85 = vld [vmem:[%s83] ss:$16 sm:%s84]
    %86 = vrot.lane.b32.xlu0 %v85, 32
    %v87 = vpop.permute.xlu0 %86
    %vm88 = vcmask 326912
    %89 = vst.msk [vmem:[#allocation0] ss:$8 sm:$0x3] %vm88, %v87
    %s90 = scalar_lea.vmem %s0, 3
    %s91 = smov 3
    %v92 = vld [vmem:[%s90] ss:$16 sm:%s91]
    %93 = vrot.lane.b32.xlu0 %v92, 24
    %v94 = vpop.permute.xlu0 %93
    %vm95 = vcmask 261312
    %96 = vst.msk [vmem:[#allocation0] ss:$8 sm:$0x3] %vm95, %v94
    %s97 = scalar_lea.vmem %s0, 2
    %s98 = smov 3
    %v99 = vld [vmem:[%s97] ss:$16 sm:%s98]
    %100 = vrot.lane.b32.xlu0 %v99, 16
    %v101 = vpop.permute.xlu0 %100
    %vm102 = vcmask 195712
    %103 = vst.msk [vmem:[#allocation0] ss:$8 sm:$0x3] %vm102, %v101
    %s104 = scalar_lea.vmem %s0, 1
    %s105 = smov 3
    %v106 = vld [vmem:[%s104] ss:$16 sm:%s105]
    %107 = vrot.lane.b32.xlu0 %v106, 8
    %v108 = vpop.permute.xlu0 %107
    %vm109 = vcmask 130112
    %110 = vst.msk [vmem:[#allocation0] ss:$8 sm:$0x3] %vm109, %v108
    %s112 = sshll.u32 1, 1
    %s113 = ssub.s32 %s112, 1
    %v115 = vld [vmem:[#allocation0] sm:%s113]
    %s116 = sshll.u32 1, 1
    %s117 = ssub.s32 %s116, 1
    %118 = vst [vmem:[%s1] sm:%s117] %v115
    %s119 = scalar_lea.vmem [#allocation0], 8
    %v120 = vld [vmem:[%s119] sm:%s113]
    %s121 = sshll.u32 1, 1
    %s122 = ssub.s32 %s121, 1
    %s123 = scalar_lea.vmem %s1, 1
    %124 = vst [vmem:[%s123] sm:%s122] %v120

// kernel: up_layer_forward.1
$region0: #{up_layer_forward.1}
  #allocation0 [shape = 'u32[]', space=smem, size = 0x4, offset = 0x4, fixed_abs, tag = 'smem constant byte address 0x4 - core index']
  #allocation1 [shape = 'u32[144,128]{1,0:T(1,128)}', space=vmem, size = 0x12000, scoped, tag = 'internal scratch']
  #allocation2 [shape = 'f32[41,64]{1,0:T(8,128)}', space=vmem, size = 0x6000, scoped, tag = 'scratch operand']
  #allocation3 [shape = 'f32[41,128]{1,0:T(8,128)}', space=vmem, size = 0x6000, scoped, tag = 'scratch operand']
  #allocation4 [shape = 'f32[41,256]{1,0:T(8,128)}', space=vmem, size = 0xc000, scoped, tag = 'scratch operand']
  %s0 = inlined_call_operand.vmem [shape: f32[2,16,64], index: 0, kind: input, shape index: {}]
  %s1 = inlined_call_operand.vmem [shape: f32[2,32,128], index: 1, kind: input, shape index: {}]
  %s2 = inlined_call_operand.vmem [shape: bf16[3,64,256], index: 2, kind: input, shape index: {}]
  %s3 = inlined_call_operand.vmem [shape: bf16[3,128,256], index: 3, kind: input, shape index: {}]
  %s4 = inlined_call_operand.vmem [shape: bf16[3,256,256], index: 4, kind: input, shape index: {}]
  %s5 = inlined_call_operand.vmem [shape: f32[1,256], index: 5, kind: input, shape index: {}]
  %s6 = inlined_call_operand.vmem [shape: f32[1,256], index: 6, kind: input, shape index: {}]
  %s7 = inlined_call_operand.vmem [shape: f32[2,32,256], index: 7, kind: output, shape index: {}]
  %s8 = sld [smem:[#allocation0]]
  $region61: #{up_layer_forward.1} parent=0
    _
  %s10 = ssub.s32 1, %s8
  %s11 = scalar_select 0, %s10, %s8
  loop: start=0, step=1, limit=4
  $region2: #{up_layer_forward.1} parent=0 // loop_pre_header
    _
  $region3: #{up_layer_forward.1} parent=0 // loop_header
    %s13 = sphi 0, %s17
    %p14 = scmp.ge.s32.totalorder %s13, 4
    %s23 = sphi 0, %s25
    %s26 = sphi 0, %s23
    %s27 = sphi 0, %s26
    %s43 = sphi 0, %s27
    %s49 = sphi 0, %s51
    %s52 = sphi 0, %s49
    %s53 = sphi 0, %s52
    %s69 = sphi 0, %s53
    %s73 = sphi 0, %s73
    %s75 = sphi 0, %s73
    %s76 = sphi 0, %s75
    %s90 = sphi 0, %s76
    %s94 = sphi 0, %s94
    %s96 = sphi 0, %s94
    %s97 = sphi 0, %s96
    %s111 = sphi 0, %s97
    %s115 = sphi 0, %s115
    %s117 = sphi 0, %s115
    %s118 = sphi 0, %s117
    %s132 = sphi 0, %s118
    %s136 = sphi 0, %s136
    %s138 = sphi 0, %s136
    %s139 = sphi 0, %s138
    %s153 = sphi 0, %s139
    %s157 = sphi 0, %s157
    %s159 = sphi 0, %s157
    %s160 = sphi 0, %s159
    %s174 = sphi 0, %s160
    %s180 = sphi 0, %s182
    %s183 = sphi 0, %s180
    %s184 = sphi 0, %s183
    %s200 = sphi 0, %s184
  $region4: #{up_layer_forward.1} parent=0 // loop_header_branch
    %16 = sbr.rel (%p14) target = $region8
  $region5: #{up_layer_forward.1} parent=0 // loop_body
    %s18 = ssub.s32 %s13, 1
    %s19 = ssub.s32 %s13, 2
    %s20 = sadd.s32 %s13, 1
    %s21 = ssub.s32 %s13, %s20
    %p22 = scmp.eq.s32.totalorder %s21, 0
    %s24 = sadd.s32 %s23, 1
    %s25 = scalar_select %p22, %s23, %s24
    %p28 = pneg %p22
    %p29 = scmp.eq.s32.totalorder %s13, 1
    %p30 = por %p28, %p29
    %p31 = scmp.ne.s32.totalorder %s23, %s26
    %p32 = scmp.eq.s32.totalorder %s13, 0
    %p33 = por %p31, %p32
    %p34 = scmp.ne.s32.totalorder %s23, %s26
    %p35 = scmp.eq.s32.totalorder %s18, 1
    %p36 = por %p34, %p35
    %p37 = scmp.ne.s32.totalorder %s26, %s27
    %p38 = scmp.eq.s32.totalorder %s18, 0
    %p39 = por %p37, %p38
    %p40 = scmp.ne.s32.totalorder %s26, %s27
    %p41 = scmp.eq.s32.totalorder %s19, 1
    %p42 = por %p40, %p41
    %p44 = scmp.ne.s32.totalorder %s27, %s43
    %p45 = scmp.eq.s32.totalorder %s19, 0
    %p46 = por %p44, %p45
    %s47 = ssub.s32 %s13, %s20
    %p48 = scmp.eq.s32.totalorder %s47, 0
    %s50 = sadd.s32 %s49, 1
    %s51 = scalar_select %p48, %s49, %s50
    %p54 = pneg %p48
    %p55 = scmp.eq.s32.totalorder %s13, 1
    %p56 = por %p54, %p55
    %p57 = scmp.ne.s32.totalorder %s49, %s52
    %p58 = scmp.eq.s32.totalorder %s13, 0
    %p59 = por %p57, %p58
    %p60 = scmp.ne.s32.totalorder %s49, %s52
    %p61 = scmp.eq.s32.totalorder %s18, 1
    %p62 = por %p60, %p61
    %p63 = scmp.ne.s32.totalorder %s52, %s53
    %p64 = scmp.eq.s32.totalorder %s18, 0
    %p65 = por %p63, %p64
    %p66 = scmp.ne.s32.totalorder %s52, %s53
    %p67 = scmp.eq.s32.totalorder %s19, 1
    %p68 = por %p66, %p67
    %p70 = scmp.ne.s32.totalorder %s53, %s69
    %p71 = scmp.eq.s32.totalorder %s19, 0
    %p72 = por %p70, %p71
    %s74 = sadd.s32 %s73, 1
    %p77 = scmp.eq.s32.totalorder %s13, 1
    %p78 = scmp.ne.s32.totalorder %s73, %s75
    %p79 = scmp.eq.s32.totalorder %s13, 0
    %p80 = por %p78, %p79
    %p81 = scmp.ne.s32.totalorder %s73, %s75
    %p82 = scmp.eq.s32.totalorder %s18, 1
    %p83 = por %p81, %p82
    %p84 = scmp.ne.s32.totalorder %s75, %s76
    %p85 = scmp.eq.s32.totalorder %s18, 0
    %p86 = por %p84, %p85
    %p87 = scmp.ne.s32.totalorder %s75, %s76
    %p88 = scmp.eq.s32.totalorder %s19, 1
    %p89 = por %p87, %p88
    %p91 = scmp.ne.s32.totalorder %s76, %s90
    %p92 = scmp.eq.s32.totalorder %s19, 0
    %p93 = por %p91, %p92
    %s95 = sadd.s32 %s94, 1
    %p98 = scmp.eq.s32.totalorder %s13, 1
    %p99 = scmp.ne.s32.totalorder %s94, %s96
    %p100 = scmp.eq.s32.totalorder %s13, 0
    %p101 = por %p99, %p100
    %p102 = scmp.ne.s32.totalorder %s94, %s96
    %p103 = scmp.eq.s32.totalorder %s18, 1
    %p104 = por %p102, %p103
    %p105 = scmp.ne.s32.totalorder %s96, %s97
    %p106 = scmp.eq.s32.totalorder %s18, 0
    %p107 = por %p105, %p106
    %p108 = scmp.ne.s32.totalorder %s96, %s97
    %p109 = scmp.eq.s32.totalorder %s19, 1
    %p110 = por %p108, %p109
    %p112 = scmp.ne.s32.totalorder %s97, %s111
    %p113 = scmp.eq.s32.totalorder %s19, 0
    %p114 = por %p112, %p113
    %s116 = sadd.s32 %s115, 1
    %p119 = scmp.eq.s32.totalorder %s13, 1
    %p120 = scmp.ne.s32.totalorder %s115, %s117
    %p121 = scmp.eq.s32.totalorder %s13, 0
    %p122 = por %p120, %p121
    %p123 = scmp.ne.s32.totalorder %s115, %s117
    %p124 = scmp.eq.s32.totalorder %s18, 1
    %p125 = por %p123, %p124
    %p126 = scmp.ne.s32.totalorder %s117, %s118
    %p127 = scmp.eq.s32.totalorder %s18, 0
    %p128 = por %p126, %p127
    %p129 = scmp.ne.s32.totalorder %s117, %s118
    %p130 = scmp.eq.s32.totalorder %s19, 1
    %p131 = por %p129, %p130
    %p133 = scmp.ne.s32.totalorder %s118, %s132
    %p134 = scmp.eq.s32.totalorder %s19, 0
    %p135 = por %p133, %p134
    %s137 = sadd.s32 %s136, 1
    %p140 = scmp.eq.s32.totalorder %s13, 1
    %p141 = scmp.ne.s32.totalorder %s136, %s138
    %p142 = scmp.eq.s32.totalorder %s13, 0
    %p143 = por %p141, %p142
    %p144 = scmp.ne.s32.totalorder %s136, %s138
    %p145 = scmp.eq.s32.totalorder %s18, 1
    %p146 = por %p144, %p145
    %p147 = scmp.ne.s32.totalorder %s138, %s139
    %p148 = scmp.eq.s32.totalorder %s18, 0
    %p149 = por %p147, %p148
    %p150 = scmp.ne.s32.totalorder %s138, %s139
    %p151 = scmp.eq.s32.totalorder %s19, 1
    %p152 = por %p150, %p151
    %p154 = scmp.ne.s32.totalorder %s139, %s153
    %p155 = scmp.eq.s32.totalorder %s19, 0
    %p156 = por %p154, %p155
    %s158 = sadd.s32 %s157, 1
    %p161 = scmp.eq.s32.totalorder %s13, 1
    %p162 = scmp.ne.s32.totalorder %s157, %s159
    %p163 = scmp.eq.s32.totalorder %s13, 0
    %p164 = por %p162, %p163
    %p165 = scmp.ne.s32.totalorder %s157, %s159
    %p166 = scmp.eq.s32.totalorder %s18, 1
    %p167 = por %p165, %p166
    %p168 = scmp.ne.s32.totalorder %s159, %s160
    %p169 = scmp.eq.s32.totalorder %s18, 0
    %p170 = por %p168, %p169
    %p171 = scmp.ne.s32.totalorder %s159, %s160
    %p172 = scmp.eq.s32.totalorder %s19, 1
    %p173 = por %p171, %p172
    %p175 = scmp.ne.s32.totalorder %s160, %s174
    %p176 = scmp.eq.s32.totalorder %s19, 0
    %p177 = por %p175, %p176
    %s178 = ssub.s32 %s13, %s20
    %p179 = scmp.eq.s32.totalorder %s178, 0
    %s181 = sadd.s32 %s180, 1
    %s182 = scalar_select %p179, %s180, %s181
    %p185 = pneg %p179
    %p186 = scmp.eq.s32.totalorder %s13, 1
    %p187 = por %p185, %p186
    %p188 = scmp.ne.s32.totalorder %s180, %s183
    %p189 = scmp.eq.s32.totalorder %s13, 0
    %p190 = por %p188, %p189
    %p191 = scmp.ne.s32.totalorder %s180, %s183
    %p192 = scmp.eq.s32.totalorder %s18, 1
    %p193 = por %p191, %p192
    %p194 = scmp.ne.s32.totalorder %s183, %s184
    %p195 = scmp.eq.s32.totalorder %s18, 0
    %p196 = por %p194, %p195
    %p197 = scmp.ne.s32.totalorder %s183, %s184
    %p198 = scmp.eq.s32.totalorder %s19, 1
    %p199 = por %p197, %p198
    %p201 = scmp.ne.s32.totalorder %s184, %s200
    %p202 = scmp.eq.s32.totalorder %s19, 0
    %p203 = por %p201, %p202
    %p204 = scmp.le.s32.totalorder 1, %s13
    %p205 = scmp.lt.s32.totalorder %s13, 3
    %p206 = pnand %p204, %p205
    %p207 = pneg %p206
    // Predicated region
    $region9: #{up_layer_forward.1} parent=5 // pred_check
      _
    $region10: #{up_layer_forward.1} parent=5 // pred_check_branch
      %209 = sbr.rel (%p206) target = $region12
    $region11: #{up_layer_forward.1} parent=5 // pred_region
      %s210 = ssub.s32 %s13, 1
      // Predicated region
      $region13: #{up_layer_forward.1} parent=11 // pred_check
        %p211 = pneg %p86
      $region14: #{up_layer_forward.1} parent=11 // pred_check_branch
        %213 = sbr.rel (%p211) target = $region16
      $region15: #{up_layer_forward.1} parent=11 // pred_region
        _
      $region16: #{up_layer_forward.1} parent=11 // pred_fallthru
        _
      // Predicated region
      $region17: #{up_layer_forward.1} parent=11 // pred_check
        %p214 = pneg %p107
      $region18: #{up_layer_forward.1} parent=11 // pred_check_branch
        %216 = sbr.rel (%p214) target = $region20
      $region19: #{up_layer_forward.1} parent=11 // pred_region
        _
      $region20: #{up_layer_forward.1} parent=11 // pred_fallthru
        _
      // Predicated region
      $region21: #{up_layer_forward.1} parent=11 // pred_check
        %p217 = pneg %p128
      $region22: #{up_layer_forward.1} parent=11 // pred_check_branch
        %219 = sbr.rel (%p217) target = $region24
      $region23: #{up_layer_forward.1} parent=11 // pred_region
        _
      $region24: #{up_layer_forward.1} parent=11 // pred_fallthru
        _
      // Predicated region
      $region25: #{up_layer_forward.1} parent=11 // pred_check
        %p220 = pneg %p149
      $region26: #{up_layer_forward.1} parent=11 // pred_check_branch
        %222 = sbr.rel (%p220) target = $region28
      $region27: #{up_layer_forward.1} parent=11 // pred_region
        _
      $region28: #{up_layer_forward.1} parent=11 // pred_fallthru
        _
      // Predicated region
      $region29: #{up_layer_forward.1} parent=11 // pred_check
        %p223 = pneg %p170
      $region30: #{up_layer_forward.1} parent=11 // pred_check_branch
        %225 = sbr.rel (%p223) target = $region32
      $region31: #{up_layer_forward.1} parent=11 // pred_region
        _
      $region32: #{up_layer_forward.1} parent=11 // pred_fallthru
        _
    $region12: #{up_layer_forward.1} parent=5 // pred_fallthru
      _
    %p226 = scmp.lt.s32.totalorder %s13, 2
    // Predicated region
    $region33: #{up_layer_forward.1} parent=5 // pred_check
      %p227 = pneg %p226
    $region34: #{up_layer_forward.1} parent=5 // pred_check_branch
      %229 = sbr.rel (%p227) target = $region36
    $region35: #{up_layer_forward.1} parent=5 // pred_region
      // Predicated region
      $region37: #{up_layer_forward.1} parent=35 // pred_check
        %p230 = pneg %p33
      $region38: #{up_layer_forward.1} parent=35 // pred_check_branch
        %232 = sbr.rel (%p230) target = $region40
      $region39: #{up_layer_forward.1} parent=35 // pred_region
        %p233 = scmp.lt.s32.totalorder %s13, 1
        %s234 = scalar_select %p233, %s13, 1
        %s235 = smul.addr %s234, 2
        %s236 = smul.addr %s235, 8
        %s237 = scalar_lea.vmem %s0, %s236
      $region40: #{up_layer_forward.1} parent=35 // pred_fallthru
        _
      // Predicated region
      $region41: #{up_layer_forward.1} parent=35 // pred_check
        %p238 = pneg %p59
      $region42: #{up_layer_forward.1} parent=35 // pred_check_branch
        %240 = sbr.rel (%p238) target = $region44
      $region43: #{up_layer_forward.1} parent=35 // pred_region
        %p241 = scmp.lt.s32.totalorder %s13, 1
        %s242 = scalar_select %p241, %s13, 1
        %s243 = smul.addr %s242, 4
        %s244 = smul.addr %s243, 8
        %s245 = scalar_lea.vmem %s1, %s244
      $region44: #{up_layer_forward.1} parent=35 // pred_fallthru
        _
    $region36: #{up_layer_forward.1} parent=5 // pred_fallthru
      _
    %p246 = scmp.le.s32.totalorder 1, %s13
    %p247 = scmp.lt.s32.totalorder %s13, 3
    %p248 = pnand %p246, %p247
    %p249 = pneg %p248
    // Predicated region
    $region45: #{up_layer_forward.1} parent=5 // pred_check
      _
    $region46: #{up_layer_forward.1} parent=5 // pred_check_branch
      %251 = sbr.rel (%p248) target = $region48
    $region47: #{up_layer_forward.1} parent=5 // pred_region
      %s252 = ssub.s32 %s13, 1
      %p253 = scmp.lt.s32.totalorder %s18, 1
      %s254 = scalar_select %p253, %s18, 1
      %s255 = smul.addr %s254, 2
      %s256 = smul.addr %s255, 8
      %s257 = scalar_lea.vmem %s0, %s256
      %p258 = pneg %p39
      %p259 = pneg %p36
      %p260 = scmp.lt.s32.totalorder %s18, 1
      %s261 = scalar_select %p260, %s18, 1
      %s262 = smul.addr %s261, 4
      %s263 = smul.addr %s262, 8
      %s264 = scalar_lea.vmem %s1, %s263
      %p265 = pneg %p65
      %p266 = pneg %p62
      %p267 = pneg %p86
      %p268 = pneg %p83
      %p269 = pneg %p107
      %p270 = pneg %p104
      %p271 = pneg %p128
      %p272 = pneg %p125
      %p273 = pneg %p149
      %p274 = pneg %p146
      %p275 = pneg %p170
      %p276 = pneg %p167
      %p277 = pneg %p196
      %p278 = pneg %p193
      %p279 = scmp.lt.s32.totalorder %s18, 1
      %s280 = scalar_select %p279, %s18, 1
      %s281 = smul.addr %s280, 8
      %s282 = smul.addr %s281, 8
      %s283 = scalar_lea.vmem %s7, %s282
      %p284 = scmp.lt.s32.totalorder %s18, 1
      %s285 = scalar_select %p284, %s18, 1
      %s286 = smul.addr %s285, 2
      %s287 = smul.addr %s286, 8
      %s288 = scalar_lea.vmem %s0, %s287
      %p289 = scmp.lt.s32.totalorder %s18, 1
      %s290 = scalar_select %p289, %s18, 1
      %s291 = smul.addr %s290, 4
      %s292 = smul.addr %s291, 8
      %s293 = scalar_lea.vmem %s1, %s292
      %p294 = scmp.lt.s32.totalorder %s18, 1
      %s295 = scalar_select %p294, %s18, 1
      %s296 = smul.addr %s295, 8
      %s297 = smul.addr %s296, 8
      %s298 = scalar_lea.vmem %s7, %s297
      %vm300 = vcmask 516096
      %301 = vst.msk [vmem:[#allocation2 + $0x7] sm:$0x1] %vm300, 0.0
      %302 = vst.msk [vmem:[#allocation2 + $0x28] sm:$0x1] %vm300, 0.0
      %303 = vst [vmem:[#allocation3 + $0x7] sm:$0x1] 0.0
      %304 = vst [vmem:[#allocation3 + $0x28] sm:$0x1] 0.0
      %v305 = vlaneseq
      %vm306 = vcmp.ge.s32.totalorder %v305, 0
      %vm307 = vcmp.lt.s32.totalorder %v305, 256
      %vm308 = vmand %vm306, %vm307
      %s309 = scalar_lea.vmem [#allocation4], 7
      %310 = vst.msk [vmem:[%s309] ss:$8 sm:$0x3] %vm308, 0.0
      %311 = vst.msk [vmem:[%s309] ss:$8 sm:$0x0] %vm308, 0.0
      %s312 = scalar_lea.vmem [#allocation4], 80
      %313 = vst.msk [vmem:[%s312] ss:$8 sm:$0x3] %vm308, 0.0
      %314 = vst.msk [vmem:[%s312] ss:$8 sm:$0x0] %vm308, 0.0
      %v315 = vld [vmem:[%s288] sm:$0x1]
      %v316 = vlaneseq
      %v317 = vshrl.u32 %v316, 7
      %v318 = vsub.s32 0, %v317
      %v319 = vrot.slane %v315, %v318
      %vm320 = vcmask 517120
      %321 = vst.msk [vmem:[#allocation2 + $0x8] sm:$0x3] %vm320, %v319
      %v322 = vld [vmem:[%s288 + $0x1] sm:$0x1]
      %v323 = vlaneseq
      %v324 = vshrl.u32 %v323, 7
      %v325 = vsub.s32 0, %v324
      %v326 = vrot.slane %v322, %v325
      %327 = vst.msk [vmem:[#allocation2 + $0xa] sm:$0x3] %vm320, %v326
      %v328 = vld [vmem:[%s288 + $0x2] sm:$0x1]
      %v329 = vlaneseq
      %v330 = vshrl.u32 %v329, 7
      %v331 = vsub.s32 0, %v330
      %v332 = vrot.slane %v328, %v331
      %333 = vst.msk [vmem:[#allocation2 + $0xc] sm:$0x3] %vm320, %v332
      %v334 = vld [vmem:[%s288 + $0x3] sm:$0x1]
      %v335 = vlaneseq
      %v336 = vshrl.u32 %v335, 7
      %v337 = vsub.s32 0, %v336
      %v338 = vrot.slane %v334, %v337
      %339 = vst.msk [vmem:[#allocation2 + $0xe] sm:$0x3] %vm320, %v338
      %v340 = vld [vmem:[%s288 + $0x4] sm:$0x1]
      %v341 = vlaneseq
      %v342 = vshrl.u32 %v341, 7
      %v343 = vsub.s32 0, %v342
      %v344 = vrot.slane %v340, %v343
      %345 = vst.msk [vmem:[#allocation2 + $0x10] sm:$0x3] %vm320, %v344
      %v346 = vld [vmem:[%s288 + $0x5] sm:$0x1]
      %v347 = vlaneseq
      %v348 = vshrl.u32 %v347, 7
      %v349 = vsub.s32 0, %v348
      %v350 = vrot.slane %v346, %v349
      %351 = vst.msk [vmem:[#allocation2 + $0x12] sm:$0x3] %vm320, %v350
      %v352 = vld [vmem:[%s288 + $0x6] sm:$0x1]
      %v353 = vlaneseq
      %v354 = vshrl.u32 %v353, 7
      %v355 = vsub.s32 0, %v354
      %v356 = vrot.slane %v352, %v355
      %357 = vst.msk [vmem:[#allocation2 + $0x14] sm:$0x3] %vm320, %v356
      %v358 = vld [vmem:[%s288 + $0x7] sm:$0x1]
      %v359 = vlaneseq
      %v360 = vshrl.u32 %v359, 7
      %v361 = vsub.s32 0, %v360
      %v362 = vrot.slane %v358, %v361
      %363 = vst.msk [vmem:[#allocation2 + $0x16] sm:$0x3] %vm320, %v362
      %v364 = vld [vmem:[%s288 + $0x8] sm:$0x1]
      %v365 = vlaneseq
      %v366 = vshrl.u32 %v365, 7
      %v367 = vsub.s32 0, %v366
      %v368 = vrot.slane %v364, %v367
      %369 = vst.msk [vmem:[#allocation2 + $0x18] sm:$0x3] %vm320, %v368
      %v370 = vld [vmem:[%s288 + $0x9] sm:$0x1]
      %v371 = vlaneseq
      %v372 = vshrl.u32 %v371, 7
      %v373 = vsub.s32 0, %v372
      %v374 = vrot.slane %v370, %v373
      %375 = vst.msk [vmem:[#allocation2 + $0x1a] sm:$0x3] %vm320, %v374
      %v376 = vld [vmem:[%s288 + $0xa] sm:$0x1]
      %v377 = vlaneseq
      %v378 = vshrl.u32 %v377, 7
      %v379 = vsub.s32 0, %v378
      %v380 = vrot.slane %v376, %v379
      %381 = vst.msk [vmem:[#allocation2 + $0x1c] sm:$0x3] %vm320, %v380
      %v382 = vld [vmem:[%s288 + $0xb] sm:$0x1]
      %v383 = vlaneseq
      %v384 = vshrl.u32 %v383, 7
      %v385 = vsub.s32 0, %v384
      %v386 = vrot.slane %v382, %v385
      %387 = vst.msk [vmem:[#allocation2 + $0x1e] sm:$0x3] %vm320, %v386
      %v388 = vld [vmem:[%s288 + $0xc] sm:$0x1]
      %v389 = vlaneseq
      %v390 = vshrl.u32 %v389, 7
      %v391 = vsub.s32 0, %v390
      %v392 = vrot.slane %v388, %v391
      %393 = vst.msk [vmem:[#allocation2 + $0x20] sm:$0x3] %vm320, %v392
      %v394 = vld [vmem:[%s288 + $0xd] sm:$0x1]
      %v395 = vlaneseq
      %v396 = vshrl.u32 %v395, 7
      %v397 = vsub.s32 0, %v396
      %v398 = vrot.slane %v394, %v397
      %399 = vst.msk [vmem:[#allocation2 + $0x22] sm:$0x3] %vm320, %v398
      %v400 = vld [vmem:[%s288 + $0xe] sm:$0x1]
      %v401 = vlaneseq
      %v402 = vshrl.u32 %v401, 7
      %v403 = vsub.s32 0, %v402
      %v404 = vrot.slane %v400, %v403
      %405 = vst.msk [vmem:[#allocation2 + $0x24] sm:$0x3] %vm320, %v404
      %v406 = vld [vmem:[%s288 + $0xf] sm:$0x1]
      %v407 = vlaneseq
      %v408 = vshrl.u32 %v407, 7
      %v409 = vsub.s32 0, %v408
      %v410 = vrot.slane %v406, %v409
      %411 = vst.msk [vmem:[#allocation2 + $0x26] sm:$0x3] %vm320, %v410
      %v412 = vld [vmem:[%s293] sm:$0xff]
      %v413 = vld [vmem:[%s293 + $0x8] sm:$0xff]
      %v414 = vld [vmem:[%s293 + $0x10] sm:$0xff]
      %v415 = vld [vmem:[%s293 + $0x18] sm:$0xff]
      %416 = vst [vmem:[#allocation3 + $0x8] sm:$0xff] %v412
      %417 = vst [vmem:[#allocation3 + $0x10] sm:$0xff] %v413
      %418 = vst [vmem:[#allocation3 + $0x18] sm:$0xff] %v414
      %419 = vst [vmem:[#allocation3 + $0x20] sm:$0xff] %v415
      %v420 = vld [vmem:[#allocation2 + $0x7] sm:$0xff]
      %v421 = vld [vmem:[#allocation2 + $0xf] sm:$0xff]
      %v422 = vld [vmem:[#allocation2 + $0x17] sm:$0xff]
      %v423 = vld [vmem:[#allocation2 + $0x1f] sm:$0xff]
      %v424 = vpack.c.bf16 %v421, %v420
      %v425 = vpack.c.bf16 %v423, %v422
      %v426 = vld [vmem:[%s2] sm:$0xff]
      %v427 = vld [vmem:[%s2 + $0x8] sm:$0xff]
      %v428 = vld [vmem:[%s2 + $0x10] sm:$0xff]
      %v429 = vld [vmem:[%s2 + $0x18] sm:$0xff]
      %v430 = vld [vmem:[%s2 + $0x20] sm:$0xff]
      %v431 = vld [vmem:[%s2 + $0x28] sm:$0xff]
      %v432 = vld [vmem:[%s2 + $0x30] sm:$0xff]
      %v433 = vld [vmem:[%s2 + $0x38] sm:$0xff]
      %v434 = vld [vmem:[#allocation2 + $0x8] sm:$0xff]
      %v435 = vld [vmem:[#allocation2 + $0x10] sm:$0xff]
      %v436 = vld [vmem:[#allocation2 + $0x18] sm:$0xff]
      %v437 = vld [vmem:[#allocation2 + $0x20] sm:$0xff]
      %v438 = vpack.c.bf16 %v435, %v434
      %v439 = vpack.c.bf16 %v437, %v436
      %s440 = scalar_lea.vmem %s2, 64
      %v441 = vld [vmem:[%s440] sm:$0xff]
      %v442 = vld [vmem:[%s440 + $0x8] sm:$0xff]
      %v443 = vld [vmem:[%s440 + $0x10] sm:$0xff]
      %v444 = vld [vmem:[%s440 + $0x18] sm:$0xff]
      %v445 = vld [vmem:[%s440 + $0x20] sm:$0xff]
      %v446 = vld [vmem:[%s440 + $0x28] sm:$0xff]
      %v447 = vld [vmem:[%s440 + $0x30] sm:$0xff]
      %v448 = vld [vmem:[%s440 + $0x38] sm:$0xff]
      %v457 = vunpack.c.l.b16 %v441
      %v458 = vunpack.c.h.b16 %v441
      %v459 = vunpack.c.l.b16 %v442
      %v460 = vunpack.c.h.b16 %v442
      %v461 = vunpack.c.l.b16 %v443
      %v462 = vunpack.c.h.b16 %v443
      %v463 = vunpack.c.l.b16 %v444
      %v464 = vunpack.c.h.b16 %v444
      %v465 = vunpack.c.l.b16 %v445
      %v466 = vunpack.c.h.b16 %v445
      %v467 = vunpack.c.l.b16 %v446
      %v468 = vunpack.c.h.b16 %v446
      %v469 = vunpack.c.l.b16 %v447
      %v470 = vunpack.c.h.b16 %v447
      %v471 = vunpack.c.l.b16 %v448
      %v472 = vunpack.c.h.b16 %v448
      %v473 = vpack.c.b16 %v459, %v457
      %v474 = vpack.c.b16 %v460, %v458
      %v475 = vpack.c.b16 %v463, %v461
      %v476 = vpack.c.b16 %v464, %v462
      %v477 = vpack.c.b16 %v467, %v465
      %v478 = vpack.c.b16 %v468, %v466
      %v479 = vpack.c.b16 %v471, %v469
      %v480 = vpack.c.b16 %v472, %v470
      %vm489 = vcmask 523264
      %v491 = vsel %vm489, %v438, 0
      %v494 = vsel %vm489, %v439, 0
      %496 = vmatprep.subr.bf16.mxu0 0
      %497 = vmatpush1.bf16.msra.mxu0 0
      %498 = vmatprep.subr.bf16.mxu0 0
      %499 = vmatpush1.bf16.msra.mxu0 0
      %500 = vmatprep.subr.bf16.mxu0 0
      %501 = vmatpush1.bf16.msra.mxu0 0
      %502 = vmatprep.subr.bf16.mxu0 0
      %503 = vmatpush1.bf16.msra.mxu0 0
      %504 = vmatprep.subr.bf16.mxu0 %v480
      %505 = vmatpush1.bf16.msra.mxu0 %v479
      %506 = vmatprep.subr.bf16.mxu0 %v478
      %507 = vmatpush1.bf16.msra.mxu0 %v477
      %508 = vmatprep.subr.bf16.mxu0 %v476
      %509 = vmatpush1.bf16.msra.mxu0 %v475
      %510 = vmatprep.subr.bf16.mxu0 %v474
      %511 = vmatpush1.bf16.msra.mxu0 %v473
      %512 = vmatprep.subr.bf16.mxu0 0
      %513 = vmatpush2.bf16.msra.mxu0 0
      %514 = vmatprep.subr.bf16.mxu0 0
      %515 = vmatpush2.bf16.msra.mxu0 0
      %516 = vmatprep.subr.bf16.mxu0 0
      %517 = vmatpush2.bf16.msra.mxu0 0
      %518 = vmatprep.subr.bf16.mxu0 0
      %519 = vmatpush2.bf16.msra.mxu0 0
      %520 = vmatprep.subr.bf16.mxu0 0
      %521 = vmatpush2.bf16.msra.mxu0 0
      %522 = vmatprep.subr.bf16.mxu0 0
      %523 = vmatpush2.bf16.msra.mxu0 0
      %524 = vmatprep.subr.bf16.mxu0 0
      %525 = vmatpush2.bf16.msra.mxu0 0
      %526 = vmatprep.subr.bf16.mxu0 0
      %527 = vmatpush2.bf16.msra.mxu0 0
      %528 = vmatprep.mubr.bf16.mxu0 0
      %529 = vmatmul.mubr.bf16.gmra.mxu0 %v491
      %v530 = vpop.f32.mrf.mxu0
      %v531 = vadd.f32 0.0, %v530
      %v532 = vpop.f32.mrf.mxu0
      %v533 = vadd.f32 0.0, %v532
      %v534 = vpop.f32.mrf.mxu0
      %v535 = vadd.f32 0.0, %v534
      %v536 = vpop.f32.mrf.mxu0
      %v537 = vadd.f32 0.0, %v536
      %538 = vmatprep.mubr.bf16.mxu0 0
      %539 = vmatmul.mubr.bf16.gmra.mxu0 %v494
      %v540 = vpop.f32.mrf.mxu0
      %v541 = vadd.f32 0.0, %v540
      %v542 = vpop.f32.mrf.mxu0
      %v543 = vadd.f32 0.0, %v542
      %v544 = vpop.f32.mrf.mxu0
      %v545 = vadd.f32 0.0, %v544
      %v546 = vpop.f32.mrf.mxu0
      %v547 = vadd.f32 0.0, %v546
      %548 = vdwg.mxu0
      %v557 = vunpack.c.l.b16 %v426
      %v558 = vunpack.c.h.b16 %v426
      %v559 = vunpack.c.l.b16 %v427
      %v560 = vunpack.c.h.b16 %v427
      %v561 = vunpack.c.l.b16 %v428
      %v562 = vunpack.c.h.b16 %v428
      %v563 = vunpack.c.l.b16 %v429
      %v564 = vunpack.c.h.b16 %v429
      %v565 = vunpack.c.l.b16 %v430
      %v566 = vunpack.c.h.b16 %v430
      %v567 = vunpack.c.l.b16 %v431
      %v568 = vunpack.c.h.b16 %v431
      %v569 = vunpack.c.l.b16 %v432
      %v570 = vunpack.c.h.b16 %v432
      %v571 = vunpack.c.l.b16 %v433
      %v572 = vunpack.c.h.b16 %v433
      %v573 = vpack.c.b16 %v559, %v557
      %v574 = vpack.c.b16 %v560, %v558
      %v575 = vpack.c.b16 %v563, %v561
      %v576 = vpack.c.b16 %v564, %v562
      %v577 = vpack.c.b16 %v567, %v565
      %v578 = vpack.c.b16 %v568, %v566
      %v579 = vpack.c.b16 %v571, %v569
      %v580 = vpack.c.b16 %v572, %v570
      %v590 = vsel %vm489, %v424, 0
      %v593 = vsel %vm489, %v425, 0
      %595 = vmatprep.subr.bf16.mxu0 0
      %596 = vmatpush1.bf16.msra.mxu0 0
      %597 = vmatprep.subr.bf16.mxu0 0
      %598 = vmatpush1.bf16.msra.mxu0 0
      %599 = vmatprep.subr.bf16.mxu0 0
      %600 = vmatpush1.bf16.msra.mxu0 0
      %601 = vmatprep.subr.bf16.mxu0 0
      %602 = vmatpush1.bf16.msra.mxu0 0
      %603 = vmatprep.subr.bf16.mxu0 %v580
      %604 = vmatpush1.bf16.msra.mxu0 %v579
      %605 = vmatprep.subr.bf16.mxu0 %v578
      %606 = vmatpush1.bf16.msra.mxu0 %v577
      %607 = vmatprep.subr.bf16.mxu0 %v576
      %608 = vmatpush1.bf16.msra.mxu0 %v575
      %609 = vmatprep.subr.bf16.mxu0 %v574
      %610 = vmatpush1.bf16.msra.mxu0 %v573
      %611 = vmatprep.subr.bf16.mxu0 0
      %612 = vmatpush2.bf16.msra.mxu0 0
      %613 = vmatprep.subr.bf16.mxu0 0
      %614 = vmatpush2.bf16.msra.mxu0 0
      %615 = vmatprep.subr.bf16.mxu0 0
      %616 = vmatpush2.bf16.msra.mxu0 0
      %617 = vmatprep.subr.bf16.mxu0 0
      %618 = vmatpush2.bf16.msra.mxu0 0
      %619 = vmatprep.subr.bf16.mxu0 0
      %620 = vmatpush2.bf16.msra.mxu0 0
      %621 = vmatprep.subr.bf16.mxu0 0
      %622 = vmatpush2.bf16.msra.mxu0 0
      %623 = vmatprep.subr.bf16.mxu0 0
      %624 = vmatpush2.bf16.msra.mxu0 0
      %625 = vmatprep.subr.bf16.mxu0 0
      %626 = vmatpush2.bf16.msra.mxu0 0
      %627 = vmatprep.mubr.bf16.mxu0 0
      %628 = vmatmul.mubr.bf16.gmra.mxu0 %v590
      %v629 = vpop.f32.mrf.mxu0
      %v630 = vadd.f32 %v531, %v629
      %v631 = vpop.f32.mrf.mxu0
      %v632 = vadd.f32 %v533, %v631
      %v633 = vpop.f32.mrf.mxu0
      %v634 = vadd.f32 %v535, %v633
      %v635 = vpop.f32.mrf.mxu0
      %v636 = vadd.f32 %v537, %v635
      %637 = vmatprep.mubr.bf16.mxu0 0
      %638 = vmatmul.mubr.bf16.gmra.mxu0 %v593
      %v639 = vpop.f32.mrf.mxu0
      %v640 = vadd.f32 %v541, %v639
      %v641 = vpop.f32.mrf.mxu0
      %v642 = vadd.f32 %v543, %v641
      %v643 = vpop.f32.mrf.mxu0
      %v644 = vadd.f32 %v545, %v643
      %v645 = vpop.f32.mrf.mxu0
      %v646 = vadd.f32 %v547, %v645
      %647 = vdwg.mxu0
      %v648 = vld [vmem:[#allocation2 + $0x9] sm:$0xff]
      %v649 = vld [vmem:[#allocation2 + $0x11] sm:$0xff]
      %v650 = vld [vmem:[#allocation2 + $0x19] sm:$0xff]
      %v651 = vld [vmem:[#allocation2 + $0x21] sm:$0xff]
      %v652 = vpack.c.bf16 %v649, %v648
      %v653 = vpack.c.bf16 %v651, %v650
      %s654 = scalar_lea.vmem %s2, 128
      %v655 = vld [vmem:[%s654] sm:$0xff]
      %v656 = vld [vmem:[%s654 + $0x8] sm:$0xff]
      %v657 = vld [vmem:[%s654 + $0x10] sm:$0xff]
      %v658 = vld [vmem:[%s654 + $0x18] sm:$0xff]
      %v659 = vld [vmem:[%s654 + $0x20] sm:$0xff]
      %v660 = vld [vmem:[%s654 + $0x28] sm:$0xff]
      %v661 = vld [vmem:[%s654 + $0x30] sm:$0xff]
      %v662 = vld [vmem:[%s654 + $0x38] sm:$0xff]
      %v671 = vunpack.c.l.b16 %v655
      %v672 = vunpack.c.h.b16 %v655
      %v673 = vunpack.c.l.b16 %v656
      %v674 = vunpack.c.h.b16 %v656
      %v675 = vunpack.c.l.b16 %v657
      %v676 = vunpack.c.h.b16 %v657
      %v677 = vunpack.c.l.b16 %v658
      %v678 = vunpack.c.h.b16 %v658
      %v679 = vunpack.c.l.b16 %v659
      %v680 = vunpack.c.h.b16 %v659
      %v681 = vunpack.c.l.b16 %v660
      %v682 = vunpack.c.h.b16 %v660
      %v683 = vunpack.c.l.b16 %v661
      %v684 = vunpack.c.h.b16 %v661
      %v685 = vunpack.c.l.b16 %v662
      %v686 = vunpack.c.h.b16 %v662
      %v687 = vpack.c.b16 %v673, %v671
      %v688 = vpack.c.b16 %v674, %v672
      %v689 = vpack.c.b16 %v677, %v675
      %v690 = vpack.c.b16 %v678, %v676
      %v691 = vpack.c.b16 %v681, %v679
      %v692 = vpack.c.b16 %v682, %v680
      %v693 = vpack.c.b16 %v685, %v683
      %v694 = vpack.c.b16 %v686, %v684
      %v704 = vsel %vm489, %v652, 0
      %v707 = vsel %vm489, %v653, 0
      %709 = vmatprep.subr.bf16.mxu0 0
      %710 = vmatpush1.bf16.msra.mxu0 0
      %711 = vmatprep.subr.bf16.mxu0 0
      %712 = vmatpush1.bf16.msra.mxu0 0
      %713 = vmatprep.subr.bf16.mxu0 0
      %714 = vmatpush1.bf16.msra.mxu0 0
      %715 = vmatprep.subr.bf16.mxu0 0
      %716 = vmatpush1.bf16.msra.mxu0 0
      %717 = vmatprep.subr.bf16.mxu0 %v694
      %718 = vmatpush1.bf16.msra.mxu0 %v693
      %719 = vmatprep.subr.bf16.mxu0 %v692
      %720 = vmatpush1.bf16.msra.mxu0 %v691
      %721 = vmatprep.subr.bf16.mxu0 %v690
      %722 = vmatpush1.bf16.msra.mxu0 %v689
      %723 = vmatprep.subr.bf16.mxu0 %v688
      %724 = vmatpush1.bf16.msra.mxu0 %v687
      %725 = vmatprep.subr.bf16.mxu0 0
      %726 = vmatpush2.bf16.msra.mxu0 0
      %727 = vmatprep.subr.bf16.mxu0 0
      %728 = vmatpush2.bf16.msra.mxu0 0
      %729 = vmatprep.subr.bf16.mxu0 0
      %730 = vmatpush2.bf16.msra.mxu0 0
      %731 = vmatprep.subr.bf16.mxu0 0
      %732 = vmatpush2.bf16.msra.mxu0 0
      %733 = vmatprep.subr.bf16.mxu0 0
      %734 = vmatpush2.bf16.msra.mxu0 0
      %735 = vmatprep.subr.bf16.mxu0 0
      %736 = vmatpush2.bf16.msra.mxu0 0
      %737 = vmatprep.subr.bf16.mxu0 0
      %738 = vmatpush2.bf16.msra.mxu0 0
      %739 = vmatprep.subr.bf16.mxu0 0
      %740 = vmatpush2.bf16.msra.mxu0 0
      %741 = vmatprep.mubr.bf16.mxu0 0
      %742 = vmatmul.mubr.bf16.gmra.mxu0 %v704
      %v743 = vpop.f32.mrf.mxu0
      %v744 = vadd.f32 0.0, %v743
      %v745 = vpop.f32.mrf.mxu0
      %v746 = vadd.f32 0.0, %v745
      %v747 = vpop.f32.mrf.mxu0
      %v748 = vadd.f32 0.0, %v747
      %v749 = vpop.f32.mrf.mxu0
      %v750 = vadd.f32 0.0, %v749
      %751 = vmatprep.mubr.bf16.mxu0 0
      %752 = vmatmul.mubr.bf16.gmra.mxu0 %v707
      %v753 = vpop.f32.mrf.mxu0
      %v754 = vadd.f32 0.0, %v753
      %v755 = vpop.f32.mrf.mxu0
      %v756 = vadd.f32 0.0, %v755
      %v757 = vpop.f32.mrf.mxu0
      %v758 = vadd.f32 0.0, %v757
      %v759 = vpop.f32.mrf.mxu0
      %v760 = vadd.f32 0.0, %v759
      %761 = vdwg.mxu0
      %v762 = vadd.f32 %v630, %v744
      %v763 = vadd.f32 %v632, %v746
      %v764 = vadd.f32 %v634, %v748
      %v765 = vadd.f32 %v636, %v750
      %v766 = vadd.f32 %v640, %v754
      %v767 = vadd.f32 %v642, %v756
      %v768 = vadd.f32 %v644, %v758
      %v769 = vadd.f32 %v646, %v760
      %v770 = vld [vmem:[#allocation3 + $0x7] sm:$0xff]
      %v771 = vld [vmem:[#allocation3 + $0xf] sm:$0xff]
      %v772 = vld [vmem:[#allocation3 + $0x17] sm:$0xff]
      %v773 = vld [vmem:[#allocation3 + $0x1f] sm:$0xff]
      %v774 = vpack.c.bf16 %v771, %v770
      %v775 = vpack.c.bf16 %v773, %v772
      %v776 = vld [vmem:[%s3] sm:$0xff]
      %v777 = vld [vmem:[%s3 + $0x8] sm:$0xff]
      %v778 = vld [vmem:[%s3 + $0x10] sm:$0xff]
      %v779 = vld [vmem:[%s3 + $0x18] sm:$0xff]
      %v780 = vld [vmem:[%s3 + $0x20] sm:$0xff]
      %v781 = vld [vmem:[%s3 + $0x28] sm:$0xff]
      %v782 = vld [vmem:[%s3 + $0x30] sm:$0xff]
      %v783 = vld [vmem:[%s3 + $0x38] sm:$0xff]
      %v784 = vld [vmem:[%s3 + $0x40] sm:$0xff]
      %v785 = vld [vmem:[%s3 + $0x48] sm:$0xff]
      %v786 = vld [vmem:[%s3 + $0x50] sm:$0xff]
      %v787 = vld [vmem:[%s3 + $0x58] sm:$0xff]
      %v788 = vld [vmem:[%s3 + $0x60] sm:$0xff]
      %v789 = vld [vmem:[%s3 + $0x68] sm:$0xff]
      %v790 = vld [vmem:[%s3 + $0x70] sm:$0xff]
      %v791 = vld [vmem:[%s3 + $0x78] sm:$0xff]
      %v808 = vunpack.c.l.b16 %v776
      %v809 = vunpack.c.h.b16 %v776
      %v810 = vunpack.c.l.b16 %v777
      %v811 = vunpack.c.h.b16 %v777
      %v812 = vunpack.c.l.b16 %v778
      %v813 = vunpack.c.h.b16 %v778
      %v814 = vunpack.c.l.b16 %v779
      %v815 = vunpack.c.h.b16 %v779
      %v816 = vunpack.c.l.b16 %v780
      %v817 = vunpack.c.h.b16 %v780
      %v818 = vunpack.c.l.b16 %v781
      %v819 = vunpack.c.h.b16 %v781
      %v820 = vunpack.c.l.b16 %v782
      %v821 = vunpack.c.h.b16 %v782
      %v822 = vunpack.c.l.b16 %v783
      %v823 = vunpack.c.h.b16 %v783
      %v824 = vunpack.c.l.b16 %v784
      %v825 = vunpack.c.h.b16 %v784
      %v826 = vunpack.c.l.b16 %v785
      %v827 = vunpack.c.h.b16 %v785
      %v828 = vunpack.c.l.b16 %v786
      %v829 = vunpack.c.h.b16 %v786
      %v830 = vunpack.c.l.b16 %v787
      %v831 = vunpack.c.h.b16 %v787
      %v832 = vunpack.c.l.b16 %v788
      %v833 = vunpack.c.h.b16 %v788
      %v834 = vunpack.c.l.b16 %v789
      %v835 = vunpack.c.h.b16 %v789
      %v836 = vunpack.c.l.b16 %v790
      %v837 = vunpack.c.h.b16 %v790
      %v838 = vunpack.c.l.b16 %v791
      %v839 = vunpack.c.h.b16 %v791
      %v840 = vpack.c.b16 %v810, %v808
      %v841 = vpack.c.b16 %v811, %v809
      %v842 = vpack.c.b16 %v814, %v812
      %v843 = vpack.c.b16 %v815, %v813
      %v844 = vpack.c.b16 %v818, %v816
      %v845 = vpack.c.b16 %v819, %v817
      %v846 = vpack.c.b16 %v822, %v820
      %v847 = vpack.c.b16 %v823, %v821
      %v848 = vpack.c.b16 %v826, %v824
      %v849 = vpack.c.b16 %v827, %v825
      %v850 = vpack.c.b16 %v830, %v828
      %v851 = vpack.c.b16 %v831, %v829
      %v852 = vpack.c.b16 %v834, %v832
      %v853 = vpack.c.b16 %v835, %v833
      %v854 = vpack.c.b16 %v838, %v836
      %v855 = vpack.c.b16 %v839, %v837
      %872 = vmatprep.subr.bf16.mxu0 %v855
      %873 = vmatpush1.bf16.msra.mxu0 %v854
      %874 = vmatprep.subr.bf16.mxu0 %v853
      %875 = vmatpush1.bf16.msra.mxu0 %v852
      %876 = vmatprep.subr.bf16.mxu0 %v851
      %877 = vmatpush1.bf16.msra.mxu0 %v850
      %878 = vmatprep.subr.bf16.mxu0 %v849
      %879 = vmatpush1.bf16.msra.mxu0 %v848
      %880 = vmatprep.subr.bf16.mxu0 %v847
      %881 = vmatpush1.bf16.msra.mxu0 %v846
      %882 = vmatprep.subr.bf16.mxu0 %v845
      %883 = vmatpush1.bf16.msra.mxu0 %v844
      %884 = vmatprep.subr.bf16.mxu0 %v843
      %885 = vmatpush1.bf16.msra.mxu0 %v842
      %886 = vmatprep.subr.bf16.mxu0 %v841
      %887 = vmatpush1.bf16.msra.mxu0 %v840
      %888 = vmatprep.subr.bf16.mxu0 0
      %889 = vmatpush2.bf16.msra.mxu0 0
      %890 = vmatprep.subr.bf16.mxu0 0
      %891 = vmatpush2.bf16.msra.mxu0 0
      %892 = vmatprep.subr.bf16.mxu0 0
      %893 = vmatpush2.bf16.msra.mxu0 0
      %894 = vmatprep.subr.bf16.mxu0 0
      %895 = vmatpush2.bf16.msra.mxu0 0
      %896 = vmatprep.subr.bf16.mxu0 0
      %897 = vmatpush2.bf16.msra.mxu0 0
      %898 = vmatprep.subr.bf16.mxu0 0
      %899 = vmatpush2.bf16.msra.mxu0 0
      %900 = vmatprep.subr.bf16.mxu0 0
      %901 = vmatpush2.bf16.msra.mxu0 0
      %902 = vmatprep.subr.bf16.mxu0 0
      %903 = vmatpush2.bf16.msra.mxu0 0
      %904 = vmatprep.mubr.bf16.mxu0 0
      %905 = vmatmul.mubr.bf16.gmra.mxu0 %v774
      %v906 = vpop.f32.mrf.mxu0
      %v907 = vadd.f32 0.0, %v906
      %v908 = vpop.f32.mrf.mxu0
      %v909 = vadd.f32 0.0, %v908
      %v910 = vpop.f32.mrf.mxu0
      %v911 = vadd.f32 0.0, %v910
      %v912 = vpop.f32.mrf.mxu0
      %v913 = vadd.f32 0.0, %v912
      %914 = vmatprep.mubr.bf16.mxu0 0
      %915 = vmatmul.mubr.bf16.gmra.mxu0 %v775
      %v916 = vpop.f32.mrf.mxu0
      %v917 = vadd.f32 0.0, %v916
      %v918 = vpop.f32.mrf.mxu0
      %v919 = vadd.f32 0.0, %v918
      %v920 = vpop.f32.mrf.mxu0
      %v921 = vadd.f32 0.0, %v920
      %v922 = vpop.f32.mrf.mxu0
      %v923 = vadd.f32 0.0, %v922
      %924 = vdwg.mxu0
      %v925 = vadd.f32 %v762, %v907
      %v926 = vadd.f32 %v763, %v909
      %v927 = vadd.f32 %v764, %v911
      %v928 = vadd.f32 %v765, %v913
      %v929 = vadd.f32 %v766, %v917
      %v930 = vadd.f32 %v767, %v919
      %v931 = vadd.f32 %v768, %v921
      %v932 = vadd.f32 %v769, %v923
      %v933 = vld [vmem:[#allocation3 + $0x8] sm:$0xff]
      %v934 = vld [vmem:[#allocation3 + $0x10] sm:$0xff]
      %v935 = vld [vmem:[#allocation3 + $0x18] sm:$0xff]
      %v936 = vld [vmem:[#allocation3 + $0x20] sm:$0xff]
      %v937 = vpack.c.bf16 %v934, %v933
      %v938 = vpack.c.bf16 %v936, %v935
      %s939 = scalar_lea.vmem %s3, 128
      %v940 = vld [vmem:[%s939] sm:$0xff]
      %v941 = vld [vmem:[%s939 + $0x8] sm:$0xff]
      %v942 = vld [vmem:[%s939 + $0x10] sm:$0xff]
      %v943 = vld [vmem:[%s939 + $0x18] sm:$0xff]
      %v944 = vld [vmem:[%s939 + $0x20] sm:$0xff]
      %v945 = vld [vmem:[%s939 + $0x28] sm:$0xff]
      %v946 = vld [vmem:[%s939 + $0x30] sm:$0xff]
      %v947 = vld [vmem:[%s939 + $0x38] sm:$0xff]
      %v948 = vld [vmem:[%s939 + $0x40] sm:$0xff]
      %v949 = vld [vmem:[%s939 + $0x48] sm:$0xff]
      %v950 = vld [vmem:[%s939 + $0x50] sm:$0xff]
      %v951 = vld [vmem:[%s939 + $0x58] sm:$0xff]
      %v952 = vld [vmem:[%s939 + $0x60] sm:$0xff]
      %v953 = vld [vmem:[%s939 + $0x68] sm:$0xff]
      %v954 = vld [vmem:[%s939 + $0x70] sm:$0xff]
      %v955 = vld [vmem:[%s939 + $0x78] sm:$0xff]
      %v972 = vunpack.c.l.b16 %v940
      %v973 = vunpack.c.h.b16 %v940
      %v974 = vunpack.c.l.b16 %v941
      %v975 = vunpack.c.h.b16 %v941
      %v976 = vunpack.c.l.b16 %v942
      %v977 = vunpack.c.h.b16 %v942
      %v978 = vunpack.c.l.b16 %v943
      %v979 = vunpack.c.h.b16 %v943
      %v980 = vunpack.c.l.b16 %v944
      %v981 = vunpack.c.h.b16 %v944
      %v982 = vunpack.c.l.b16 %v945
      %v983 = vunpack.c.h.b16 %v945
      %v984 = vunpack.c.l.b16 %v946
      %v985 = vunpack.c.h.b16 %v946
      %v986 = vunpack.c.l.b16 %v947
      %v987 = vunpack.c.h.b16 %v947
      %v988 = vunpack.c.l.b16 %v948
      %v989 = vunpack.c.h.b16 %v948
      %v990 = vunpack.c.l.b16 %v949
      %v991 = vunpack.c.h.b16 %v949
      %v992 = vunpack.c.l.b16 %v950
      %v993 = vunpack.c.h.b16 %v950
      %v994 = vunpack.c.l.b16 %v951
      %v995 = vunpack.c.h.b16 %v951
      %v996 = vunpack.c.l.b16 %v952
      %v997 = vunpack.c.h.b16 %v952
      %v998 = vunpack.c.l.b16 %v953
      %v999 = vunpack.c.h.b16 %v953
      %v1000 = vunpack.c.l.b16 %v954
      %v1001 = vunpack.c.h.b16 %v954
      %v1002 = vunpack.c.l.b16 %v955
      %v1003 = vunpack.c.h.b16 %v955
      %v1004 = vpack.c.b16 %v974, %v972
      %v1005 = vpack.c.b16 %v975, %v973
      %v1006 = vpack.c.b16 %v978, %v976
      %v1007 = vpack.c.b16 %v979, %v977
      %v1008 = vpack.c.b16 %v982, %v980
      %v1009 = vpack.c.b16 %v983, %v981
      %v1010 = vpack.c.b16 %v986, %v984
      %v1011 = vpack.c.b16 %v987, %v985
      %v1012 = vpack.c.b16 %v990, %v988
      %v1013 = vpack.c.b16 %v991, %v989
      %v1014 = vpack.c.b16 %v994, %v992
      %v1015 = vpack.c.b16 %v995, %v993
      %v1016 = vpack.c.b16 %v998, %v996
      %v1017 = vpack.c.b16 %v999, %v997
      %v1018 = vpack.c.b16 %v1002, %v1000
      %v1019 = vpack.c.b16 %v1003, %v1001
      %1036 = vmatprep.subr.bf16.mxu0 %v1019
      %1037 = vmatpush1.bf16.msra.mxu0 %v1018
      %1038 = vmatprep.subr.bf16.mxu0 %v1017
      %1039 = vmatpush1.bf16.msra.mxu0 %v1016
      %1040 = vmatprep.subr.bf16.mxu0 %v1015
      %1041 = vmatpush1.bf16.msra.mxu0 %v1014
      %1042 = vmatprep.subr.bf16.mxu0 %v1013
      %1043 = vmatpush1.bf16.msra.mxu0 %v1012
      %1044 = vmatprep.subr.bf16.mxu0 %v1011
      %1045 = vmatpush1.bf16.msra.mxu0 %v1010
      %1046 = vmatprep.subr.bf16.mxu0 %v1009
      %1047 = vmatpush1.bf16.msra.mxu0 %v1008
      %1048 = vmatprep.subr.bf16.mxu0 %v1007
      %1049 = vmatpush1.bf16.msra.mxu0 %v1006
      %1050 = vmatprep.subr.bf16.mxu0 %v1005
      %1051 = vmatpush1.bf16.msra.mxu0 %v1004
      %1052 = vmatprep.subr.bf16.mxu0 0
      %1053 = vmatpush2.bf16.msra.mxu0 0
      %1054 = vmatprep.subr.bf16.mxu0 0
      %1055 = vmatpush2.bf16.msra.mxu0 0
      %1056 = vmatprep.subr.bf16.mxu0 0
      %1057 = vmatpush2.bf16.msra.mxu0 0
      %1058 = vmatprep.subr.bf16.mxu0 0
      %1059 = vmatpush2.bf16.msra.mxu0 0
      %1060 = vmatprep.subr.bf16.mxu0 0
      %1061 = vmatpush2.bf16.msra.mxu0 0
      %1062 = vmatprep.subr.bf16.mxu0 0
      %1063 = vmatpush2.bf16.msra.mxu0 0
      %1064 = vmatprep.subr.bf16.mxu0 0
      %1065 = vmatpush2.bf16.msra.mxu0 0
      %1066 = vmatprep.subr.bf16.mxu0 0
      %1067 = vmatpush2.bf16.msra.mxu0 0
      %1068 = vmatprep.mubr.bf16.mxu0 0
      %1069 = vmatmul.mubr.bf16.gmra.mxu0 %v937
      %v1070 = vpop.f32.mrf.mxu0
      %v1071 = vadd.f32 0.0, %v1070
      %v1072 = vpop.f32.mrf.mxu0
      %v1073 = vadd.f32 0.0, %v1072
      %v1074 = vpop.f32.mrf.mxu0
      %v1075 = vadd.f32 0.0, %v1074
      %v1076 = vpop.f32.mrf.mxu0
      %v1077 = vadd.f32 0.0, %v1076
      %1078 = vmatprep.mubr.bf16.mxu0 0
      %1079 = vmatmul.mubr.bf16.gmra.mxu0 %v938
      %v1080 = vpop.f32.mrf.mxu0
      %v1081 = vadd.f32 0.0, %v1080
      %v1082 = vpop.f32.mrf.mxu0
      %v1083 = vadd.f32 0.0, %v1082
      %v1084 = vpop.f32.mrf.mxu0
      %v1085 = vadd.f32 0.0, %v1084
      %v1086 = vpop.f32.mrf.mxu0
      %v1087 = vadd.f32 0.0, %v1086
      %1088 = vdwg.mxu0
      %v1089 = vadd.f32 %v925, %v1071
      %v1090 = vadd.f32 %v926, %v1073
      %v1091 = vadd.f32 %v927, %v1075
      %v1092 = vadd.f32 %v928, %v1077
      %v1093 = vadd.f32 %v929, %v1081
      %v1094 = vadd.f32 %v930, %v1083
      %v1095 = vadd.f32 %v931, %v1085
      %v1096 = vadd.f32 %v932, %v1087
      %v1097 = vld [vmem:[#allocation3 + $0x9] sm:$0xff]
      %v1098 = vld [vmem:[#allocation3 + $0x11] sm:$0xff]
      %v1099 = vld [vmem:[#allocation3 + $0x19] sm:$0xff]
      %v1100 = vld [vmem:[#allocation3 + $0x21] sm:$0xff]
      %v1101 = vpack.c.bf16 %v1098, %v1097
      %v1102 = vpack.c.bf16 %v1100, %v1099
      %s1103 = scalar_lea.vmem %s3, 256
      %v1104 = vld [vmem:[%s1103] sm:$0xff]
      %v1105 = vld [vmem:[%s1103 + $0x8] sm:$0xff]
      %v1106 = vld [vmem:[%s1103 + $0x10] sm:$0xff]
      %v1107 = vld [vmem:[%s1103 + $0x18] sm:$0xff]
      %v1108 = vld [vmem:[%s1103 + $0x20] sm:$0xff]
      %v1109 = vld [vmem:[%s1103 + $0x28] sm:$0xff]
      %v1110 = vld [vmem:[%s1103 + $0x30] sm:$0xff]
      %v1111 = vld [vmem:[%s1103 + $0x38] sm:$0xff]
      %v1112 = vld [vmem:[%s1103 + $0x40] sm:$0xff]
      %v1113 = vld [vmem:[%s1103 + $0x48] sm:$0xff]
      %v1114 = vld [vmem:[%s1103 + $0x50] sm:$0xff]
      %v1115 = vld [vmem:[%s1103 + $0x58] sm:$0xff]
      %v1116 = vld [vmem:[%s1103 + $0x60] sm:$0xff]
      %v1117 = vld [vmem:[%s1103 + $0x68] sm:$0xff]
      %v1118 = vld [vmem:[%s1103 + $0x70] sm:$0xff]
      %v1119 = vld [vmem:[%s1103 + $0x78] sm:$0xff]
      %v1136 = vunpack.c.l.b16 %v1104
      %v1137 = vunpack.c.h.b16 %v1104
      %v1138 = vunpack.c.l.b16 %v1105
      %v1139 = vunpack.c.h.b16 %v1105
      %v1140 = vunpack.c.l.b16 %v1106
      %v1141 = vunpack.c.h.b16 %v1106
      %v1142 = vunpack.c.l.b16 %v1107
      %v1143 = vunpack.c.h.b16 %v1107
      %v1144 = vunpack.c.l.b16 %v1108
      %v1145 = vunpack.c.h.b16 %v1108
      %v1146 = vunpack.c.l.b16 %v1109
      %v1147 = vunpack.c.h.b16 %v1109
      %v1148 = vunpack.c.l.b16 %v1110
      %v1149 = vunpack.c.h.b16 %v1110
      %v1150 = vunpack.c.l.b16 %v1111
      %v1151 = vunpack.c.h.b16 %v1111
      %v1152 = vunpack.c.l.b16 %v1112
      %v1153 = vunpack.c.h.b16 %v1112
      %v1154 = vunpack.c.l.b16 %v1113
      %v1155 = vunpack.c.h.b16 %v1113
      %v1156 = vunpack.c.l.b16 %v1114
      %v1157 = vunpack.c.h.b16 %v1114
      %v1158 = vunpack.c.l.b16 %v1115
      %v1159 = vunpack.c.h.b16 %v1115
      %v1160 = vunpack.c.l.b16 %v1116
      %v1161 = vunpack.c.h.b16 %v1116
      %v1162 = vunpack.c.l.b16 %v1117
      %v1163 = vunpack.c.h.b16 %v1117
      %v1164 = vunpack.c.l.b16 %v1118
      %v1165 = vunpack.c.h.b16 %v1118
      %v1166 = vunpack.c.l.b16 %v1119
      %v1167 = vunpack.c.h.b16 %v1119
      %v1168 = vpack.c.b16 %v1138, %v1136
      %v1169 = vpack.c.b16 %v1139, %v1137
      %v1170 = vpack.c.b16 %v1142, %v1140
      %v1171 = vpack.c.b16 %v1143, %v1141
      %v1172 = vpack.c.b16 %v1146, %v1144
      %v1173 = vpack.c.b16 %v1147, %v1145
      %v1174 = vpack.c.b16 %v1150, %v1148
      %v1175 = vpack.c.b16 %v1151, %v1149
      %v1176 = vpack.c.b16 %v1154, %v1152
      %v1177 = vpack.c.b16 %v1155, %v1153
      %v1178 = vpack.c.b16 %v1158, %v1156
      %v1179 = vpack.c.b16 %v1159, %v1157
      %v1180 = vpack.c.b16 %v1162, %v1160
      %v1181 = vpack.c.b16 %v1163, %v1161
      %v1182 = vpack.c.b16 %v1166, %v1164
      %v1183 = vpack.c.b16 %v1167, %v1165
      %1200 = vmatprep.subr.bf16.mxu0 %v1183
      %1201 = vmatpush1.bf16.msra.mxu0 %v1182
      %1202 = vmatprep.subr.bf16.mxu0 %v1181
      %1203 = vmatpush1.bf16.msra.mxu0 %v1180
      %1204 = vmatprep.subr.bf16.mxu0 %v1179
      %1205 = vmatpush1.bf16.msra.mxu0 %v1178
      %1206 = vmatprep.subr.bf16.mxu0 %v1177
      %1207 = vmatpush1.bf16.msra.mxu0 %v1176
      %1208 = vmatprep.subr.bf16.mxu0 %v1175
      %1209 = vmatpush1.bf16.msra.mxu0 %v1174
      %1210 = vmatprep.subr.bf16.mxu0 %v1173
      %1211 = vmatpush1.bf16.msra.mxu0 %v1172
      %1212 = vmatprep.subr.bf16.mxu0 %v1171
      %1213 = vmatpush1.bf16.msra.mxu0 %v1170
      %1214 = vmatprep.subr.bf16.mxu0 %v1169
      %1215 = vmatpush1.bf16.msra.mxu0 %v1168
      %1216 = vmatprep.subr.bf16.mxu0 0
      %1217 = vmatpush2.bf16.msra.mxu0 0
      %1218 = vmatprep.subr.bf16.mxu0 0
      %1219 = vmatpush2.bf16.msra.mxu0 0
      %1220 = vmatprep.subr.bf16.mxu0 0
      %1221 = vmatpush2.bf16.msra.mxu0 0
      %1222 = vmatprep.subr.bf16.mxu0 0
      %1223 = vmatpush2.bf16.msra.mxu0 0
      %1224 = vmatprep.subr.bf16.mxu0 0
      %1225 = vmatpush2.bf16.msra.mxu0 0
      %1226 = vmatprep.subr.bf16.mxu0 0
      %1227 = vmatpush2.bf16.msra.mxu0 0
      %1228 = vmatprep.subr.bf16.mxu0 0
      %1229 = vmatpush2.bf16.msra.mxu0 0
      %1230 = vmatprep.subr.bf16.mxu0 0
      %1231 = vmatpush2.bf16.msra.mxu0 0
      %1232 = vmatprep.mubr.bf16.mxu0 0
      %1233 = vmatmul.mubr.bf16.gmra.mxu0 %v1101
      %v1234 = vpop.f32.mrf.mxu0
      %v1235 = vadd.f32 0.0, %v1234
      %v1236 = vpop.f32.mrf.mxu0
      %v1237 = vadd.f32 0.0, %v1236
      %v1238 = vpop.f32.mrf.mxu0
      %v1239 = vadd.f32 0.0, %v1238
      %v1240 = vpop.f32.mrf.mxu0
      %v1241 = vadd.f32 0.0, %v1240
      %1242 = vmatprep.mubr.bf16.mxu0 0
      %1243 = vmatmul.mubr.bf16.gmra.mxu0 %v1102
      %v1244 = vpop.f32.mrf.mxu0
      %v1245 = vadd.f32 0.0, %v1244
      %v1246 = vpop.f32.mrf.mxu0
      %v1247 = vadd.f32 0.0, %v1246
      %v1248 = vpop.f32.mrf.mxu0
      %v1249 = vadd.f32 0.0, %v1248
      %v1250 = vpop.f32.mrf.mxu0
      %v1251 = vadd.f32 0.0, %v1250
      %1252 = vdwg.mxu0
      %v1253 = vadd.f32 %v1089, %v1235
      %v1254 = vadd.f32 %v1090, %v1237
      %v1255 = vadd.f32 %v1091, %v1239
      %v1256 = vadd.f32 %v1092, %v1241
      %v1257 = vadd.f32 %v1093, %v1245
      %v1258 = vadd.f32 %v1094, %v1247
      %v1259 = vadd.f32 %v1095, %v1249
      %v1260 = vadd.f32 %v1096, %v1251
      %v1261 = vld [vmem:[%s5] sm:$0x3]
      %v1263 = vlaneseq
      %v1264 = vshrl.u32 %v1263, 7
      %v1265 = vsub.s32 0, %v1264
      %v1266 = vrot.slane %v1261, %v1265
      %v1267 = vlaneseq
      %v1268 = vshrl.u32 %v1267, 7
      %v1269 = vsub.s32 1, %v1268
      %v1270 = vrot.slane %v1261, %v1269
      %v1273 = vadd.f32 %v1253, %v1266
      %v1274 = vadd.f32 %v1254, %v1270
      %v1275 = vadd.f32 %v1255, %v1266
      %v1276 = vadd.f32 %v1256, %v1270
      %v1277 = vadd.f32 %v1257, %v1266
      %v1278 = vadd.f32 %v1258, %v1270
      %v1279 = vadd.f32 %v1259, %v1266
      %v1280 = vadd.f32 %v1260, %v1270
      %v1281 = vmax.f32 %v1273, 0.0
      %v1282 = vmax.f32 %v1274, 0.0
      %v1283 = vmax.f32 %v1275, 0.0
      %v1284 = vmax.f32 %v1276, 0.0
      %v1285 = vmax.f32 %v1277, 0.0
      %v1286 = vmax.f32 %v1278, 0.0
      %v1287 = vmax.f32 %v1279, 0.0
      %v1288 = vmax.f32 %v1280, 0.0
      %1289 = vst [vmem:[#allocation4 + $0x10] sm:$0xff] %v1281
      %1290 = vst [vmem:[#allocation4 + $0x18] sm:$0xff] %v1282
      %1291 = vst [vmem:[#allocation4 + $0x20] sm:$0xff] %v1283
      %1292 = vst [vmem:[#allocation4 + $0x28] sm:$0xff] %v1284
      %1293 = vst [vmem:[#allocation4 + $0x30] sm:$0xff] %v1285
      %1294 = vst [vmem:[#allocation4 + $0x38] sm:$0xff] %v1286
      %1295 = vst [vmem:[#allocation4 + $0x40] sm:$0xff] %v1287
      %1296 = vst [vmem:[#allocation4 + $0x48] sm:$0xff] %v1288
      %v1297 = vld [vmem:[#allocation4] sm:$0x80]
      %v1298 = vld [vmem:[#allocation4 + $0x8] sm:$0x80]
      %v1299 = vld [vmem:[#allocation4 + $0x10] sm:$0xff]
      %v1300 = vld [vmem:[#allocation4 + $0x18] sm:$0xff]
      %v1301 = vld [vmem:[#allocation4 + $0x20] sm:$0xff]
      %v1302 = vld [vmem:[#allocation4 + $0x28] sm:$0xff]
      %v1303 = vld [vmem:[#allocation4 + $0x30] sm:$0xff]
      %v1304 = vld [vmem:[#allocation4 + $0x38] sm:$0xff]
      %v1305 = vld [vmem:[#allocation4 + $0x40] sm:$0x7f]
      %v1306 = vld [vmem:[#allocation4 + $0x48] sm:$0x7f]
      %v1307 = vpack.c.bf16 %v1299, %v1297
      %v1308 = vpack.c.bf16 %v1300, %v1298
      %v1309 = vpack.c.bf16 %v1303, %v1301
      %v1310 = vpack.c.bf16 %v1304, %v1302
      %v1311 = vpack.c.bf16 %v1305, %v1305
      %v1312 = vpack.c.bf16 %v1306, %v1306
      %v1313 = vld [vmem:[%s4] sm:$0xff]
      %v1314 = vld [vmem:[%s4 + $0x8] sm:$0xff]
      %v1315 = vld [vmem:[%s4 + $0x10] sm:$0xff]
      %v1316 = vld [vmem:[%s4 + $0x18] sm:$0xff]
      %v1317 = vld [vmem:[%s4 + $0x20] sm:$0xff]
      %v1318 = vld [vmem:[%s4 + $0x28] sm:$0xff]
      %v1319 = vld [vmem:[%s4 + $0x30] sm:$0xff]
      %v1320 = vld [vmem:[%s4 + $0x38] sm:$0xff]
      %v1321 = vld [vmem:[%s4 + $0x40] sm:$0xff]
      %v1322 = vld [vmem:[%s4 + $0x48] sm:$0xff]
      %v1323 = vld [vmem:[%s4 + $0x50] sm:$0xff]
      %v1324 = vld [vmem:[%s4 + $0x58] sm:$0xff]
      %v1325 = vld [vmem:[%s4 + $0x60] sm:$0xff]
      %v1326 = vld [vmem:[%s4 + $0x68] sm:$0xff]
      %v1327 = vld [vmem:[%s4 + $0x70] sm:$0xff]
      %v1328 = vld [vmem:[%s4 + $0x78] sm:$0xff]
      %v1329 = vld [vmem:[%s4 + $0x80] sm:$0xff]
      %v1330 = vld [vmem:[%s4 + $0x88] sm:$0xff]
      %v1331 = vld [vmem:[%s4 + $0x90] sm:$0xff]
      %v1332 = vld [vmem:[%s4 + $0x98] sm:$0xff]
      %v1333 = vld [vmem:[%s4 + $0xa0] sm:$0xff]
      %v1334 = vld [vmem:[%s4 + $0xa8] sm:$0xff]
      %v1335 = vld [vmem:[%s4 + $0xb0] sm:$0xff]
      %v1336 = vld [vmem:[%s4 + $0xb8] sm:$0xff]
      %v1337 = vld [vmem:[%s4 + $0xc0] sm:$0xff]
      %v1338 = vld [vmem:[%s4 + $0xc8] sm:$0xff]
      %v1339 = vld [vmem:[%s4 + $0xd0] sm:$0xff]
      %v1340 = vld [vmem:[%s4 + $0xd8] sm:$0xff]
      %v1341 = vld [vmem:[%s4 + $0xe0] sm:$0xff]
      %v1342 = vld [vmem:[%s4 + $0xe8] sm:$0xff]
      %v1343 = vld [vmem:[%s4 + $0xf0] sm:$0xff]
      %v1344 = vld [vmem:[%s4 + $0xf8] sm:$0xff]
      %v1345 = vld [vmem:[#allocation4 + $0x40] sm:$0xff]
      %v1346 = vld [vmem:[#allocation4 + $0x48] sm:$0xff]
      %v1347 = vpack.c.bf16 %v1301, %v1299
      %v1348 = vpack.c.bf16 %v1302, %v1300
      %v1349 = vpack.c.bf16 %v1345, %v1303
      %v1350 = vpack.c.bf16 %v1346, %v1304
      %s1351 = scalar_lea.vmem %s4, 256
      %v1352 = vld [vmem:[%s1351] sm:$0xff]
      %v1353 = vld [vmem:[%s1351 + $0x8] sm:$0xff]
      %v1354 = vld [vmem:[%s1351 + $0x10] sm:$0xff]
      %v1355 = vld [vmem:[%s1351 + $0x18] sm:$0xff]
      %v1356 = vld [vmem:[%s1351 + $0x20] sm:$0xff]
      %v1357 = vld [vmem:[%s1351 + $0x28] sm:$0xff]
      %v1358 = vld [vmem:[%s1351 + $0x30] sm:$0xff]
      %v1359 = vld [vmem:[%s1351 + $0x38] sm:$0xff]
      %v1360 = vld [vmem:[%s1351 + $0x40] sm:$0xff]
      %v1361 = vld [vmem:[%s1351 + $0x48] sm:$0xff]
      %v1362 = vld [vmem:[%s1351 + $0x50] sm:$0xff]
      %v1363 = vld [vmem:[%s1351 + $0x58] sm:$0xff]
      %v1364 = vld [vmem:[%s1351 + $0x60] sm:$0xff]
      %v1365 = vld [vmem:[%s1351 + $0x68] sm:$0xff]
      %v1366 = vld [vmem:[%s1351 + $0x70] sm:$0xff]
      %v1367 = vld [vmem:[%s1351 + $0x78] sm:$0xff]
      %v1368 = vld [vmem:[%s1351 + $0x80] sm:$0xff]
      %v1369 = vld [vmem:[%s1351 + $0x88] sm:$0xff]
      %v1370 = vld [vmem:[%s1351 + $0x90] sm:$0xff]
      %v1371 = vld [vmem:[%s1351 + $0x98] sm:$0xff]
      %v1372 = vld [vmem:[%s1351 + $0xa0] sm:$0xff]
      %v1373 = vld [vmem:[%s1351 + $0xa8] sm:$0xff]
      %v1374 = vld [vmem:[%s1351 + $0xb0] sm:$0xff]
      %v1375 = vld [vmem:[%s1351 + $0xb8] sm:$0xff]
      %v1376 = vld [vmem:[%s1351 + $0xc0] sm:$0xff]
      %v1377 = vld [vmem:[%s1351 + $0xc8] sm:$0xff]
      %v1378 = vld [vmem:[%s1351 + $0xd0] sm:$0xff]
      %v1379 = vld [vmem:[%s1351 + $0xd8] sm:$0xff]
      %v1380 = vld [vmem:[%s1351 + $0xe0] sm:$0xff]
      %v1381 = vld [vmem:[%s1351 + $0xe8] sm:$0xff]
      %v1382 = vld [vmem:[%s1351 + $0xf0] sm:$0xff]
      %v1383 = vld [vmem:[%s1351 + $0xf8] sm:$0xff]
      %v1416 = vunpack.c.l.b16 %v1352
      %v1417 = vunpack.c.h.b16 %v1352
      %v1418 = vunpack.c.l.b16 %v1353
      %v1419 = vunpack.c.h.b16 %v1353
      %v1420 = vunpack.c.l.b16 %v1354
      %v1421 = vunpack.c.h.b16 %v1354
      %v1422 = vunpack.c.l.b16 %v1355
      %v1423 = vunpack.c.h.b16 %v1355
      %v1424 = vunpack.c.l.b16 %v1356
      %v1425 = vunpack.c.h.b16 %v1356
      %v1426 = vunpack.c.l.b16 %v1357
      %v1427 = vunpack.c.h.b16 %v1357
      %v1428 = vunpack.c.l.b16 %v1358
      %v1429 = vunpack.c.h.b16 %v1358
      %v1430 = vunpack.c.l.b16 %v1359
      %v1431 = vunpack.c.h.b16 %v1359
      %v1432 = vunpack.c.l.b16 %v1360
      %v1433 = vunpack.c.h.b16 %v1360
      %v1434 = vunpack.c.l.b16 %v1361
      %v1435 = vunpack.c.h.b16 %v1361
      %v1436 = vunpack.c.l.b16 %v1362
      %v1437 = vunpack.c.h.b16 %v1362
      %v1438 = vunpack.c.l.b16 %v1363
      %v1439 = vunpack.c.h.b16 %v1363
      %v1440 = vunpack.c.l.b16 %v1364
      %v1441 = vunpack.c.h.b16 %v1364
      %v1442 = vunpack.c.l.b16 %v1365
      %v1443 = vunpack.c.h.b16 %v1365
      %v1444 = vunpack.c.l.b16 %v1366
      %v1445 = vunpack.c.h.b16 %v1366
      %v1446 = vunpack.c.l.b16 %v1367
      %v1447 = vunpack.c.h.b16 %v1367
      %v1448 = vunpack.c.l.b16 %v1368
      %v1449 = vunpack.c.h.b16 %v1368
      %v1450 = vunpack.c.l.b16 %v1369
      %v1451 = vunpack.c.h.b16 %v1369
      %v1452 = vunpack.c.l.b16 %v1370
      %v1453 = vunpack.c.h.b16 %v1370
      %v1454 = vunpack.c.l.b16 %v1371
      %v1455 = vunpack.c.h.b16 %v1371
      %v1456 = vunpack.c.l.b16 %v1372
      %v1457 = vunpack.c.h.b16 %v1372
      %v1458 = vunpack.c.l.b16 %v1373
      %v1459 = vunpack.c.h.b16 %v1373
      %v1460 = vunpack.c.l.b16 %v1374
      %v1461 = vunpack.c.h.b16 %v1374
      %v1462 = vunpack.c.l.b16 %v1375
      %v1463 = vunpack.c.h.b16 %v1375
      %v1464 = vunpack.c.l.b16 %v1376
      %v1465 = vunpack.c.h.b16 %v1376
      %v1466 = vunpack.c.l.b16 %v1377
      %v1467 = vunpack.c.h.b16 %v1377
      %v1468 = vunpack.c.l.b16 %v1378
      %v1469 = vunpack.c.h.b16 %v1378
      %v1470 = vunpack.c.l.b16 %v1379
      %v1471 = vunpack.c.h.b16 %v1379
      %v1472 = vunpack.c.l.b16 %v1380
      %v1473 = vunpack.c.h.b16 %v1380
      %v1474 = vunpack.c.l.b16 %v1381
      %v1475 = vunpack.c.h.b16 %v1381
      %v1476 = vunpack.c.l.b16 %v1382
      %v1477 = vunpack.c.h.b16 %v1382
      %v1478 = vunpack.c.l.b16 %v1383
      %v1479 = vunpack.c.h.b16 %v1383
      %v1480 = vpack.c.b16 %v1418, %v1416
      %v1481 = vpack.c.b16 %v1419, %v1417
      %v1482 = vpack.c.b16 %v1422, %v1420
      %v1483 = vpack.c.b16 %v1423, %v1421
      %v1484 = vpack.c.b16 %v1426, %v1424
      %v1485 = vpack.c.b16 %v1427, %v1425
      %v1486 = vpack.c.b16 %v1430, %v1428
      %v1487 = vpack.c.b16 %v1431, %v1429
      %v1488 = vpack.c.b16 %v1434, %v1432
      %v1489 = vpack.c.b16 %v1435, %v1433
      %v1490 = vpack.c.b16 %v1438, %v1436
      %v1491 = vpack.c.b16 %v1439, %v1437
      %v1492 = vpack.c.b16 %v1442, %v1440
      %v1493 = vpack.c.b16 %v1443, %v1441
      %v1494 = vpack.c.b16 %v1446, %v1444
      %v1495 = vpack.c.b16 %v1447, %v1445
      %v1496 = vpack.c.b16 %v1450, %v1448
      %v1497 = vpack.c.b16 %v1451, %v1449
      %v1498 = vpack.c.b16 %v1454, %v1452
      %v1499 = vpack.c.b16 %v1455, %v1453
      %v1500 = vpack.c.b16 %v1458, %v1456
      %v1501 = vpack.c.b16 %v1459, %v1457
      %v1502 = vpack.c.b16 %v1462, %v1460
      %v1503 = vpack.c.b16 %v1463, %v1461
      %v1504 = vpack.c.b16 %v1466, %v1464
      %v1505 = vpack.c.b16 %v1467, %v1465
      %v1506 = vpack.c.b16 %v1470, %v1468
      %v1507 = vpack.c.b16 %v1471, %v1469
      %v1508 = vpack.c.b16 %v1474, %v1472
      %v1509 = vpack.c.b16 %v1475, %v1473
      %v1510 = vpack.c.b16 %v1478, %v1476
      %v1511 = vpack.c.b16 %v1479, %v1477
      %1544 = vmatprep.subr.bf16.mxu0 %v1495
      %1545 = vmatpush1.bf16.msra.mxu0 %v1494
      %1546 = vmatprep.subr.bf16.mxu0 %v1493
      %1547 = vmatpush1.bf16.msra.mxu0 %v1492
      %1548 = vmatprep.subr.bf16.mxu0 %v1491
      %1549 = vmatpush1.bf16.msra.mxu0 %v1490
      %1550 = vmatprep.subr.bf16.mxu0 %v1489
      %1551 = vmatpush1.bf16.msra.mxu0 %v1488
      %1552 = vmatprep.subr.bf16.mxu0 %v1487
      %1553 = vmatpush1.bf16.msra.mxu0 %v1486
      %1554 = vmatprep.subr.bf16.mxu0 %v1485
      %1555 = vmatpush1.bf16.msra.mxu0 %v1484
      %1556 = vmatprep.subr.bf16.mxu0 %v1483
      %1557 = vmatpush1.bf16.msra.mxu0 %v1482
      %1558 = vmatprep.subr.bf16.mxu0 %v1481
      %1559 = vmatpush1.bf16.msra.mxu0 %v1480
      %1560 = vmatprep.subr.bf16.mxu0 %v1511
      %1561 = vmatpush2.bf16.msra.mxu0 %v1510
      %1562 = vmatprep.subr.bf16.mxu0 %v1509
      %1563 = vmatpush2.bf16.msra.mxu0 %v1508
      %1564 = vmatprep.subr.bf16.mxu0 %v1507
      %1565 = vmatpush2.bf16.msra.mxu0 %v1506
      %1566 = vmatprep.subr.bf16.mxu0 %v1505
      %1567 = vmatpush2.bf16.msra.mxu0 %v1504
      %1568 = vmatprep.subr.bf16.mxu0 %v1503
      %1569 = vmatpush2.bf16.msra.mxu0 %v1502
      %1570 = vmatprep.subr.bf16.mxu0 %v1501
      %1571 = vmatpush2.bf16.msra.mxu0 %v1500
      %1572 = vmatprep.subr.bf16.mxu0 %v1499
      %1573 = vmatpush2.bf16.msra.mxu0 %v1498
      %1574 = vmatprep.subr.bf16.mxu0 %v1497
      %1575 = vmatpush2.bf16.msra.mxu0 %v1496
      %1576 = vmatprep.mubr.bf16.mxu0 %v1348
      %1577 = vmatmul.mubr.bf16.gmra.mxu0 %v1347
      %v1578 = vpop.f32.mrf.mxu0
      %v1579 = vadd.f32 0.0, %v1578
      %v1580 = vpop.f32.mrf.mxu0
      %v1581 = vadd.f32 0.0, %v1580
      %v1582 = vpop.f32.mrf.mxu0
      %v1583 = vadd.f32 0.0, %v1582
      %v1584 = vpop.f32.mrf.mxu0
      %v1585 = vadd.f32 0.0, %v1584
      %1586 = vmatprep.mubr.bf16.mxu0 %v1350
      %1587 = vmatmul.mubr.bf16.gmra.mxu0 %v1349
      %v1588 = vpop.f32.mrf.mxu0
      %v1589 = vadd.f32 0.0, %v1588
      %v1590 = vpop.f32.mrf.mxu0
      %v1591 = vadd.f32 0.0, %v1590
      %v1592 = vpop.f32.mrf.mxu0
      %v1593 = vadd.f32 0.0, %v1592
      %v1594 = vpop.f32.mrf.mxu0
      %v1595 = vadd.f32 0.0, %v1594
      %1596 = vdwg.mxu0
      %vm1597 = vsmask.f32 4352
      %v1599 = vshrl.u32 %v1307, 16
      %v1601 = vrot.slane %v1599, 3
      %v1602 = vshll.u32 %v1307, 16
      %v1604 = vrot.slane %v1602, 4
      %v1605 = vor.u32 %v1601, %v1604
      %v1607 = vshrl.u32 %v1309, 16
      %v1609 = vrot.slane %v1607, 3
      %v1610 = vshll.u32 %v1309, 16
      %v1612 = vrot.slane %v1610, 4
      %v1613 = vor.u32 %v1609, %v1612
      %v1614 = vsel %vm1597, %v1605, %v1613
      %v1616 = vshrl.u32 %v1308, 16
      %v1618 = vrot.slane %v1616, 3
      %v1619 = vshll.u32 %v1308, 16
      %v1621 = vrot.slane %v1619, 4
      %v1622 = vor.u32 %v1618, %v1621
      %v1624 = vshrl.u32 %v1310, 16
      %v1626 = vrot.slane %v1624, 3
      %v1627 = vshll.u32 %v1310, 16
      %v1629 = vrot.slane %v1627, 4
      %v1630 = vor.u32 %v1626, %v1629
      %v1631 = vsel %vm1597, %v1622, %v1630
      %v1633 = vshrl.u32 %v1311, 16
      %v1635 = vrot.slane %v1633, 3
      %v1636 = vshll.u32 %v1311, 16
      %v1638 = vrot.slane %v1636, 4
      %v1639 = vor.u32 %v1635, %v1638
      %v1640 = vsel %vm1597, %v1613, %v1639
      %v1642 = vshrl.u32 %v1312, 16
      %v1644 = vrot.slane %v1642, 3
      %v1645 = vshll.u32 %v1312, 16
      %v1647 = vrot.slane %v1645, 4
      %v1648 = vor.u32 %v1644, %v1647
      %v1649 = vsel %vm1597, %v1630, %v1648
      %v1686 = vunpack.c.l.b16 %v1313
      %v1687 = vunpack.c.h.b16 %v1313
      %v1688 = vunpack.c.l.b16 %v1314
      %v1689 = vunpack.c.h.b16 %v1314
      %v1690 = vunpack.c.l.b16 %v1315
      %v1691 = vunpack.c.h.b16 %v1315
      %v1692 = vunpack.c.l.b16 %v1316
      %v1693 = vunpack.c.h.b16 %v1316
      %v1694 = vunpack.c.l.b16 %v1317
      %v1695 = vunpack.c.h.b16 %v1317
      %v1696 = vunpack.c.l.b16 %v1318
      %v1697 = vunpack.c.h.b16 %v1318
      %v1698 = vunpack.c.l.b16 %v1319
      %v1699 = vunpack.c.h.b16 %v1319
      %v1700 = vunpack.c.l.b16 %v1320
      %v1701 = vunpack.c.h.b16 %v1320
      %v1702 = vunpack.c.l.b16 %v1321
      %v1703 = vunpack.c.h.b16 %v1321
      %v1704 = vunpack.c.l.b16 %v1322
      %v1705 = vunpack.c.h.b16 %v1322
      %v1706 = vunpack.c.l.b16 %v1323
      %v1707 = vunpack.c.h.b16 %v1323
      %v1708 = vunpack.c.l.b16 %v1324
      %v1709 = vunpack.c.h.b16 %v1324
      %v1710 = vunpack.c.l.b16 %v1325
      %v1711 = vunpack.c.h.b16 %v1325
      %v1712 = vunpack.c.l.b16 %v1326
      %v1713 = vunpack.c.h.b16 %v1326
      %v1714 = vunpack.c.l.b16 %v1327
      %v1715 = vunpack.c.h.b16 %v1327
      %v1716 = vunpack.c.l.b16 %v1328
      %v1717 = vunpack.c.h.b16 %v1328
      %v1718 = vunpack.c.l.b16 %v1329
      %v1719 = vunpack.c.h.b16 %v1329
      %v1720 = vunpack.c.l.b16 %v1330
      %v1721 = vunpack.c.h.b16 %v1330
      %v1722 = vunpack.c.l.b16 %v1331
      %v1723 = vunpack.c.h.b16 %v1331
      %v1724 = vunpack.c.l.b16 %v1332
      %v1725 = vunpack.c.h.b16 %v1332
      %v1726 = vunpack.c.l.b16 %v1333
      %v1727 = vunpack.c.h.b16 %v1333
      %v1728 = vunpack.c.l.b16 %v1334
      %v1729 = vunpack.c.h.b16 %v1334
      %v1730 = vunpack.c.l.b16 %v1335
      %v1731 = vunpack.c.h.b16 %v1335
      %v1732 = vunpack.c.l.b16 %v1336
      %v1733 = vunpack.c.h.b16 %v1336
      %v1734 = vunpack.c.l.b16 %v1337
      %v1735 = vunpack.c.h.b16 %v1337
      %v1736 = vunpack.c.l.b16 %v1338
      %v1737 = vunpack.c.h.b16 %v1338
      %v1738 = vunpack.c.l.b16 %v1339
      %v1739 = vunpack.c.h.b16 %v1339
      %v1740 = vunpack.c.l.b16 %v1340
      %v1741 = vunpack.c.h.b16 %v1340
      %v1742 = vunpack.c.l.b16 %v1341
      %v1743 = vunpack.c.h.b16 %v1341
      %v1744 = vunpack.c.l.b16 %v1342
      %v1745 = vunpack.c.h.b16 %v1342
      %v1746 = vunpack.c.l.b16 %v1343
      %v1747 = vunpack.c.h.b16 %v1343
      %v1748 = vunpack.c.l.b16 %v1344
      %v1749 = vunpack.c.h.b16 %v1344
      %v1750 = vpack.c.b16 %v1688, %v1686
      %v1751 = vpack.c.b16 %v1689, %v1687
      %v1752 = vpack.c.b16 %v1692, %v1690
      %v1753 = vpack.c.b16 %v1693, %v1691
      %v1754 = vpack.c.b16 %v1696, %v1694
      %v1755 = vpack.c.b16 %v1697, %v1695
      %v1756 = vpack.c.b16 %v1700, %v1698
      %v1757 = vpack.c.b16 %v1701, %v1699
      %v1758 = vpack.c.b16 %v1704, %v1702
      %v1759 = vpack.c.b16 %v1705, %v1703
      %v1760 = vpack.c.b16 %v1708, %v1706
      %v1761 = vpack.c.b16 %v1709, %v1707
      %v1762 = vpack.c.b16 %v1712, %v1710
      %v1763 = vpack.c.b16 %v1713, %v1711
      %v1764 = vpack.c.b16 %v1716, %v1714
      %v1765 = vpack.c.b16 %v1717, %v1715
      %v1766 = vpack.c.b16 %v1720, %v1718
      %v1767 = vpack.c.b16 %v1721, %v1719
      %v1768 = vpack.c.b16 %v1724, %v1722
      %v1769 = vpack.c.b16 %v1725, %v1723
      %v1770 = vpack.c.b16 %v1728, %v1726
      %v1771 = vpack.c.b16 %v1729, %v1727
      %v1772 = vpack.c.b16 %v1732, %v1730
      %v1773 = vpack.c.b16 %v1733, %v1731
      %v1774 = vpack.c.b16 %v1736, %v1734
      %v1775 = vpack.c.b16 %v1737, %v1735
      %v1776 = vpack.c.b16 %v1740, %v1738
      %v1777 = vpack.c.b16 %v1741, %v1739
      %v1778 = vpack.c.b16 %v1744, %v1742
      %v1779 = vpack.c.b16 %v1745, %v1743
      %v1780 = vpack.c.b16 %v1748, %v1746
      %v1781 = vpack.c.b16 %v1749, %v1747
      %1814 = vmatprep.subr.bf16.mxu0 %v1765
      %1815 = vmatpush1.bf16.msra.mxu0 %v1764
      %1816 = vmatprep.subr.bf16.mxu0 %v1763
      %1817 = vmatpush1.bf16.msra.mxu0 %v1762
      %1818 = vmatprep.subr.bf16.mxu0 %v1761
      %1819 = vmatpush1.bf16.msra.mxu0 %v1760
      %1820 = vmatprep.subr.bf16.mxu0 %v1759
      %1821 = vmatpush1.bf16.msra.mxu0 %v1758
      %1822 = vmatprep.subr.bf16.mxu0 %v1757
      %1823 = vmatpush1.bf16.msra.mxu0 %v1756
      %1824 = vmatprep.subr.bf16.mxu0 %v1755
      %1825 = vmatpush1.bf16.msra.mxu0 %v1754
      %1826 = vmatprep.subr.bf16.mxu0 %v1753
      %1827 = vmatpush1.bf16.msra.mxu0 %v1752
      %1828 = vmatprep.subr.bf16.mxu0 %v1751
      %1829 = vmatpush1.bf16.msra.mxu0 %v1750
      %1830 = vmatprep.subr.bf16.mxu0 %v1781
      %1831 = vmatpush2.bf16.msra.mxu0 %v1780
      %1832 = vmatprep.subr.bf16.mxu0 %v1779
      %1833 = vmatpush2.bf16.msra.mxu0 %v1778
      %1834 = vmatprep.subr.bf16.mxu0 %v1777
      %1835 = vmatpush2.bf16.msra.mxu0 %v1776
      %1836 = vmatprep.subr.bf16.mxu0 %v1775
      %1837 = vmatpush2.bf16.msra.mxu0 %v1774
      %1838 = vmatprep.subr.bf16.mxu0 %v1773
      %1839 = vmatpush2.bf16.msra.mxu0 %v1772
      %1840 = vmatprep.subr.bf16.mxu0 %v1771
      %1841 = vmatpush2.bf16.msra.mxu0 %v1770
      %1842 = vmatprep.subr.bf16.mxu0 %v1769
      %1843 = vmatpush2.bf16.msra.mxu0 %v1768
      %1844 = vmatprep.subr.bf16.mxu0 %v1767
      %1845 = vmatpush2.bf16.msra.mxu0 %v1766
      %1846 = vmatprep.mubr.bf16.mxu0 %v1631
      %1847 = vmatmul.mubr.bf16.gmra.mxu0 %v1614
      %v1848 = vpop.f32.mrf.mxu0
      %v1849 = vadd.f32 %v1579, %v1848
      %v1850 = vpop.f32.mrf.mxu0
      %v1851 = vadd.f32 %v1581, %v1850
      %v1852 = vpop.f32.mrf.mxu0
      %v1853 = vadd.f32 %v1583, %v1852
      %v1854 = vpop.f32.mrf.mxu0
      %v1855 = vadd.f32 %v1585, %v1854
      %1856 = vmatprep.mubr.bf16.mxu0 %v1649
      %1857 = vmatmul.mubr.bf16.gmra.mxu0 %v1640
      %v1858 = vpop.f32.mrf.mxu0
      %v1859 = vadd.f32 %v1589, %v1858
      %v1860 = vpop.f32.mrf.mxu0
      %v1861 = vadd.f32 %v1591, %v1860
      %v1862 = vpop.f32.mrf.mxu0
      %v1863 = vadd.f32 %v1593, %v1862
      %v1864 = vpop.f32.mrf.mxu0
      %v1865 = vadd.f32 %v1595, %v1864
      %1866 = vdwg.mxu0
      %v1867 = vld [vmem:[#allocation4 + $0x10] sm:$0xfe]
      %v1868 = vld [vmem:[#allocation4 + $0x18] sm:$0xfe]
      %v1869 = vld [vmem:[#allocation4 + $0x20] sm:$0xff]
      %v1870 = vld [vmem:[#allocation4 + $0x28] sm:$0xff]
      %v1871 = vld [vmem:[#allocation4 + $0x30] sm:$0xff]
      %v1872 = vld [vmem:[#allocation4 + $0x38] sm:$0xff]
      %v1873 = vld [vmem:[#allocation4 + $0x40] sm:$0xff]
      %v1874 = vld [vmem:[#allocation4 + $0x48] sm:$0xff]
      %v1875 = vld [vmem:[#allocation4 + $0x50] sm:$0x1]
      %v1876 = vld [vmem:[#allocation4 + $0x58] sm:$0x1]
      %v1877 = vpack.c.bf16 %v1869, %v1867
      %v1878 = vpack.c.bf16 %v1870, %v1868
      %v1879 = vpack.c.bf16 %v1873, %v1871
      %v1880 = vpack.c.bf16 %v1874, %v1872
      %v1881 = vpack.c.bf16 %v1875, %v1875
      %v1882 = vpack.c.bf16 %v1876, %v1876
      %s1883 = scalar_lea.vmem %s4, 512
      %v1884 = vld [vmem:[%s1883] sm:$0xff]
      %v1885 = vld [vmem:[%s1883 + $0x8] sm:$0xff]
      %v1886 = vld [vmem:[%s1883 + $0x10] sm:$0xff]
      %v1887 = vld [vmem:[%s1883 + $0x18] sm:$0xff]
      %v1888 = vld [vmem:[%s1883 + $0x20] sm:$0xff]
      %v1889 = vld [vmem:[%s1883 + $0x28] sm:$0xff]
      %v1890 = vld [vmem:[%s1883 + $0x30] sm:$0xff]
      %v1891 = vld [vmem:[%s1883 + $0x38] sm:$0xff]
      %v1892 = vld [vmem:[%s1883 + $0x40] sm:$0xff]
      %v1893 = vld [vmem:[%s1883 + $0x48] sm:$0xff]
      %v1894 = vld [vmem:[%s1883 + $0x50] sm:$0xff]
      %v1895 = vld [vmem:[%s1883 + $0x58] sm:$0xff]
      %v1896 = vld [vmem:[%s1883 + $0x60] sm:$0xff]
      %v1897 = vld [vmem:[%s1883 + $0x68] sm:$0xff]
      %v1898 = vld [vmem:[%s1883 + $0x70] sm:$0xff]
      %v1899 = vld [vmem:[%s1883 + $0x78] sm:$0xff]
      %v1900 = vld [vmem:[%s1883 + $0x80] sm:$0xff]
      %v1901 = vld [vmem:[%s1883 + $0x88] sm:$0xff]
      %v1902 = vld [vmem:[%s1883 + $0x90] sm:$0xff]
      %v1903 = vld [vmem:[%s1883 + $0x98] sm:$0xff]
      %v1904 = vld [vmem:[%s1883 + $0xa0] sm:$0xff]
      %v1905 = vld [vmem:[%s1883 + $0xa8] sm:$0xff]
      %v1906 = vld [vmem:[%s1883 + $0xb0] sm:$0xff]
      %v1907 = vld [vmem:[%s1883 + $0xb8] sm:$0xff]
      %v1908 = vld [vmem:[%s1883 + $0xc0] sm:$0xff]
      %v1909 = vld [vmem:[%s1883 + $0xc8] sm:$0xff]
      %v1910 = vld [vmem:[%s1883 + $0xd0] sm:$0xff]
      %v1911 = vld [vmem:[%s1883 + $0xd8] sm:$0xff]
      %v1912 = vld [vmem:[%s1883 + $0xe0] sm:$0xff]
      %v1913 = vld [vmem:[%s1883 + $0xe8] sm:$0xff]
      %v1914 = vld [vmem:[%s1883 + $0xf0] sm:$0xff]
      %v1915 = vld [vmem:[%s1883 + $0xf8] sm:$0xff]
      %vm1916 = vsmask.f32 7424
      %v1918 = vshrl.u32 %v1877, 16
      %v1920 = vshll.u32 %v1877, 16
      %v1922 = vrot.slane %v1920, 1
      %v1923 = vor.u32 %v1918, %v1922
      %v1925 = vshll.u32 %v1879, 16
      %v1927 = vrot.slane %v1925, 1
      %v1928 = vsel %vm1916, %v1923, %v1927
      %v1930 = vshrl.u32 %v1878, 16
      %v1932 = vshll.u32 %v1878, 16
      %v1934 = vrot.slane %v1932, 1
      %v1935 = vor.u32 %v1930, %v1934
      %v1937 = vshll.u32 %v1880, 16
      %v1939 = vrot.slane %v1937, 1
      %v1940 = vsel %vm1916, %v1935, %v1939
      %v1941 = vshrl.u32 %v1879, 16
      %v1943 = vor.u32 %v1941, %v1927
      %v1945 = vshll.u32 %v1881, 16
      %v1947 = vrot.slane %v1945, 1
      %v1948 = vsel %vm1916, %v1943, %v1947
      %v1949 = vshrl.u32 %v1880, 16
      %v1951 = vor.u32 %v1949, %v1939
      %v1953 = vshll.u32 %v1882, 16
      %v1955 = vrot.slane %v1953, 1
      %v1956 = vsel %vm1916, %v1951, %v1955
      %v1993 = vunpack.c.l.b16 %v1884
      %v1994 = vunpack.c.h.b16 %v1884
      %v1995 = vunpack.c.l.b16 %v1885
      %v1996 = vunpack.c.h.b16 %v1885
      %v1997 = vunpack.c.l.b16 %v1886
      %v1998 = vunpack.c.h.b16 %v1886
      %v1999 = vunpack.c.l.b16 %v1887
      %v2000 = vunpack.c.h.b16 %v1887
      %v2001 = vunpack.c.l.b16 %v1888
      %v2002 = vunpack.c.h.b16 %v1888
      %v2003 = vunpack.c.l.b16 %v1889
      %v2004 = vunpack.c.h.b16 %v1889
      %v2005 = vunpack.c.l.b16 %v1890
      %v2006 = vunpack.c.h.b16 %v1890
      %v2007 = vunpack.c.l.b16 %v1891
      %v2008 = vunpack.c.h.b16 %v1891
      %v2009 = vunpack.c.l.b16 %v1892
      %v2010 = vunpack.c.h.b16 %v1892
      %v2011 = vunpack.c.l.b16 %v1893
      %v2012 = vunpack.c.h.b16 %v1893
      %v2013 = vunpack.c.l.b16 %v1894
      %v2014 = vunpack.c.h.b16 %v1894
      %v2015 = vunpack.c.l.b16 %v1895
      %v2016 = vunpack.c.h.b16 %v1895
      %v2017 = vunpack.c.l.b16 %v1896
      %v2018 = vunpack.c.h.b16 %v1896
      %v2019 = vunpack.c.l.b16 %v1897
      %v2020 = vunpack.c.h.b16 %v1897
      %v2021 = vunpack.c.l.b16 %v1898
      %v2022 = vunpack.c.h.b16 %v1898
      %v2023 = vunpack.c.l.b16 %v1899
      %v2024 = vunpack.c.h.b16 %v1899
      %v2025 = vunpack.c.l.b16 %v1900
      %v2026 = vunpack.c.h.b16 %v1900
      %v2027 = vunpack.c.l.b16 %v1901
      %v2028 = vunpack.c.h.b16 %v1901
      %v2029 = vunpack.c.l.b16 %v1902
      %v2030 = vunpack.c.h.b16 %v1902
      %v2031 = vunpack.c.l.b16 %v1903
      %v2032 = vunpack.c.h.b16 %v1903
      %v2033 = vunpack.c.l.b16 %v1904
      %v2034 = vunpack.c.h.b16 %v1904
      %v2035 = vunpack.c.l.b16 %v1905
      %v2036 = vunpack.c.h.b16 %v1905
      %v2037 = vunpack.c.l.b16 %v1906
      %v2038 = vunpack.c.h.b16 %v1906
      %v2039 = vunpack.c.l.b16 %v1907
      %v2040 = vunpack.c.h.b16 %v1907
      %v2041 = vunpack.c.l.b16 %v1908
      %v2042 = vunpack.c.h.b16 %v1908
      %v2043 = vunpack.c.l.b16 %v1909
      %v2044 = vunpack.c.h.b16 %v1909
      %v2045 = vunpack.c.l.b16 %v1910
      %v2046 = vunpack.c.h.b16 %v1910
      %v2047 = vunpack.c.l.b16 %v1911
      %v2048 = vunpack.c.h.b16 %v1911
      %v2049 = vunpack.c.l.b16 %v1912
      %v2050 = vunpack.c.h.b16 %v1912
      %v2051 = vunpack.c.l.b16 %v1913
      %v2052 = vunpack.c.h.b16 %v1913
      %v2053 = vunpack.c.l.b16 %v1914
      %v2054 = vunpack.c.h.b16 %v1914
      %v2055 = vunpack.c.l.b16 %v1915
      %v2056 = vunpack.c.h.b16 %v1915
      %v2057 = vpack.c.b16 %v1995, %v1993
      %v2058 = vpack.c.b16 %v1996, %v1994
      %v2059 = vpack.c.b16 %v1999, %v1997
      %v2060 = vpack.c.b16 %v2000, %v1998
      %v2061 = vpack.c.b16 %v2003, %v2001
      %v2062 = vpack.c.b16 %v2004, %v2002
      %v2063 = vpack.c.b16 %v2007, %v2005
      %v2064 = vpack.c.b16 %v2008, %v2006
      %v2065 = vpack.c.b16 %v2011, %v2009
      %v2066 = vpack.c.b16 %v2012, %v2010
      %v2067 = vpack.c.b16 %v2015, %v2013
      %v2068 = vpack.c.b16 %v2016, %v2014
      %v2069 = vpack.c.b16 %v2019, %v2017
      %v2070 = vpack.c.b16 %v2020, %v2018
      %v2071 = vpack.c.b16 %v2023, %v2021
      %v2072 = vpack.c.b16 %v2024, %v2022
      %v2073 = vpack.c.b16 %v2027, %v2025
      %v2074 = vpack.c.b16 %v2028, %v2026
      %v2075 = vpack.c.b16 %v2031, %v2029
      %v2076 = vpack.c.b16 %v2032, %v2030
      %v2077 = vpack.c.b16 %v2035, %v2033
      %v2078 = vpack.c.b16 %v2036, %v2034
      %v2079 = vpack.c.b16 %v2039, %v2037
      %v2080 = vpack.c.b16 %v2040, %v2038
      %v2081 = vpack.c.b16 %v2043, %v2041
      %v2082 = vpack.c.b16 %v2044, %v2042
      %v2083 = vpack.c.b16 %v2047, %v2045
      %v2084 = vpack.c.b16 %v2048, %v2046
      %v2085 = vpack.c.b16 %v2051, %v2049
      %v2086 = vpack.c.b16 %v2052, %v2050
      %v2087 = vpack.c.b16 %v2055, %v2053
      %v2088 = vpack.c.b16 %v2056, %v2054
      %2121 = vmatprep.subr.bf16.mxu0 %v2072
      %2122 = vmatpush1.bf16.msra.mxu0 %v2071
      %2123 = vmatprep.subr.bf16.mxu0 %v2070
      %2124 = vmatpush1.bf16.msra.mxu0 %v2069
      %2125 = vmatprep.subr.bf16.mxu0 %v2068
      %2126 = vmatpush1.bf16.msra.mxu0 %v2067
      %2127 = vmatprep.subr.bf16.mxu0 %v2066
      %2128 = vmatpush1.bf16.msra.mxu0 %v2065
      %2129 = vmatprep.subr.bf16.mxu0 %v2064
      %2130 = vmatpush1.bf16.msra.mxu0 %v2063
      %2131 = vmatprep.subr.bf16.mxu0 %v2062
      %2132 = vmatpush1.bf16.msra.mxu0 %v2061
      %2133 = vmatprep.subr.bf16.mxu0 %v2060
      %2134 = vmatpush1.bf16.msra.mxu0 %v2059
      %2135 = vmatprep.subr.bf16.mxu0 %v2058
      %2136 = vmatpush1.bf16.msra.mxu0 %v2057
      %2137 = vmatprep.subr.bf16.mxu0 %v2088
      %2138 = vmatpush2.bf16.msra.mxu0 %v2087
      %2139 = vmatprep.subr.bf16.mxu0 %v2086
      %2140 = vmatpush2.bf16.msra.mxu0 %v2085
      %2141 = vmatprep.subr.bf16.mxu0 %v2084
      %2142 = vmatpush2.bf16.msra.mxu0 %v2083
      %2143 = vmatprep.subr.bf16.mxu0 %v2082
      %2144 = vmatpush2.bf16.msra.mxu0 %v2081
      %2145 = vmatprep.subr.bf16.mxu0 %v2080
      %2146 = vmatpush2.bf16.msra.mxu0 %v2079
      %2147 = vmatprep.subr.bf16.mxu0 %v2078
      %2148 = vmatpush2.bf16.msra.mxu0 %v2077
      %2149 = vmatprep.subr.bf16.mxu0 %v2076
      %2150 = vmatpush2.bf16.msra.mxu0 %v2075
      %2151 = vmatprep.subr.bf16.mxu0 %v2074
      %2152 = vmatpush2.bf16.msra.mxu0 %v2073
      %2153 = vmatprep.mubr.bf16.mxu0 %v1940
      %2154 = vmatmul.mubr.bf16.gmra.mxu0 %v1928
      %v2155 = vpop.f32.mrf.mxu0
      %v2156 = vadd.f32 0.0, %v2155
      %v2157 = vpop.f32.mrf.mxu0
      %v2158 = vadd.f32 0.0, %v2157
      %v2159 = vpop.f32.mrf.mxu0
      %v2160 = vadd.f32 0.0, %v2159
      %v2161 = vpop.f32.mrf.mxu0
      %v2162 = vadd.f32 0.0, %v2161
      %2163 = vmatprep.mubr.bf16.mxu0 %v1956
      %2164 = vmatmul.mubr.bf16.gmra.mxu0 %v1948
      %v2165 = vpop.f32.mrf.mxu0
      %v2166 = vadd.f32 0.0, %v2165
      %v2167 = vpop.f32.mrf.mxu0
      %v2168 = vadd.f32 0.0, %v2167
      %v2169 = vpop.f32.mrf.mxu0
      %v2170 = vadd.f32 0.0, %v2169
      %v2171 = vpop.f32.mrf.mxu0
      %v2172 = vadd.f32 0.0, %v2171
      %2173 = vdwg.mxu0
      %v2174 = vadd.f32 %v1849, %v2156
      %v2175 = vadd.f32 %v1851, %v2158
      %v2176 = vadd.f32 %v1853, %v2160
      %v2177 = vadd.f32 %v1855, %v2162
      %v2178 = vadd.f32 %v1859, %v2166
      %v2179 = vadd.f32 %v1861, %v2168
      %v2180 = vadd.f32 %v1863, %v2170
      %v2181 = vadd.f32 %v1865, %v2172
      %v2182 = vld [vmem:[%s6] sm:$0x3]
      %v2184 = vlaneseq
      %v2185 = vshrl.u32 %v2184, 7
      %v2186 = vsub.s32 0, %v2185
      %v2187 = vrot.slane %v2182, %v2186
      %v2188 = vlaneseq
      %v2189 = vshrl.u32 %v2188, 7
      %v2190 = vsub.s32 1, %v2189
      %v2191 = vrot.slane %v2182, %v2190
      %v2194 = vadd.f32 %v2174, %v2187
      %v2195 = vadd.f32 %v2175, %v2191
      %v2196 = vadd.f32 %v2176, %v2187
      %v2197 = vadd.f32 %v2177, %v2191
      %v2198 = vadd.f32 %v2178, %v2187
      %v2199 = vadd.f32 %v2179, %v2191
      %v2200 = vadd.f32 %v2180, %v2187
      %v2201 = vadd.f32 %v2181, %v2191
      %v2202 = vmax.f32 %v2194, 0.0
      %v2203 = vmax.f32 %v2195, 0.0
      %v2204 = vmax.f32 %v2196, 0.0
      %v2205 = vmax.f32 %v2197, 0.0
      %v2206 = vmax.f32 %v2198, 0.0
      %v2207 = vmax.f32 %v2199, 0.0
      %v2208 = vmax.f32 %v2200, 0.0
      %v2209 = vmax.f32 %v2201, 0.0
      %2210 = vst [vmem:[%s298] sm:$0xff] %v2202
      %2211 = vst [vmem:[%s298 + $0x8] sm:$0xff] %v2203
      %2212 = vst [vmem:[%s298 + $0x10] sm:$0xff] %v2204
      %2213 = vst [vmem:[%s298 + $0x18] sm:$0xff] %v2205
      %2214 = vst [vmem:[%s298 + $0x20] sm:$0xff] %v2206
      %2215 = vst [vmem:[%s298 + $0x28] sm:$0xff] %v2207
      %2216 = vst [vmem:[%s298 + $0x30] sm:$0xff] %v2208
      %2217 = vst [vmem:[%s298 + $0x38] sm:$0xff] %v2209
      %p2218 = scmp.lt.s32.totalorder %s18, 1
      %s2219 = scalar_select %p2218, %s18, 1
      %s2220 = smul.addr %s2219, 8
      %s2221 = smul.addr %s2220, 8
      %s2222 = scalar_lea.vmem %s7, %s2221
      // Predicated region
      $region49: #{up_layer_forward.1} parent=47 // pred_check
        %p2223 = pneg %p193
      $region50: #{up_layer_forward.1} parent=47 // pred_check_branch
        %2225 = sbr.rel (%p2223) target = $region52
      $region51: #{up_layer_forward.1} parent=47 // pred_region
        _
      $region52: #{up_layer_forward.1} parent=47 // pred_fallthru
        _
    $region48: #{up_layer_forward.1} parent=5 // pred_fallthru
      _
    %p2226 = scmp.le.s32.totalorder 2, %s13
    // Predicated region
    $region53: #{up_layer_forward.1} parent=5 // pred_check
      %p2227 = pneg %p2226
    $region54: #{up_layer_forward.1} parent=5 // pred_check_branch
      %2229 = sbr.rel (%p2227) target = $region56
    $region55: #{up_layer_forward.1} parent=5 // pred_region
      %s2230 = ssub.s32 %s13, 2
      // Predicated region
      $region57: #{up_layer_forward.1} parent=55 // pred_check
        %p2231 = pneg %p199
      $region58: #{up_layer_forward.1} parent=55 // pred_check_branch
        %2233 = sbr.rel (%p2231) target = $region60
      $region59: #{up_layer_forward.1} parent=55 // pred_region
        %p2234 = scmp.lt.s32.totalorder %s19, 1
        %s2235 = scalar_select %p2234, %s19, 1
        %s2236 = smul.addr %s2235, 8
        %s2237 = smul.addr %s2236, 8
        %s2238 = scalar_lea.vmem %s7, %s2237
      $region60: #{up_layer_forward.1} parent=55 // pred_fallthru
        _
    $region56: #{up_layer_forward.1} parent=5 // pred_fallthru
      _
  $region6: #{up_layer_forward.1} parent=0 // loop_footer
    %s17 = sadd.s32 1, %s13
  $region7: #{up_layer_forward.1} parent=0 // loop_footer_branch
    %12 = sbr.rel target = $region3
  $region8: #{up_layer_forward.1} parent=0 // loop_exit
    _

</llo_original>
